<compile_context>
chip_gen: v7x
topology: tpu7x:2x2x1
jax: 0.10.0
libtpu: 0.0.40
codegen_flags: <defaults>
</compile_context>

<pallas_src>
import math

import jax
import jax.numpy as jnp
from jax.experimental import pallas as pl
from jax.experimental.pallas import tpu as pltpu


# ----------------------------- kernel --------------------------------------
def _sae_kernel(x_ref, we_ref, be_ref, wd_ref, bd_ref,          # inputs
                xr_ref, acts_ref, l2p_ref, l1p_ref,              # outputs
                xc_ref, acc_ref):                                # scratch
    # grid = (batch_tiles, hidden_tiles); hidden axis (k) is the innermost reduction.
    k = pl.program_id(1)

    @pl.when(k == 0)
    def _():
        # Hoisted once per batch tile (not repeated per hidden tile): zero the f32
        # decoder accumulator and compute the centred input in the MXU compute dtype.
        acc_ref[...] = jnp.zeros_like(acc_ref)
        xc = x_ref[...].astype(jnp.float32) - bd_ref[...].astype(jnp.float32)
        xc_ref[...] = xc.astype(xc_ref.dtype)

    # Encoder slab: relu((x - b_dec) @ W_enc[:, k_tile] + b_enc[k_tile]).
    # Weights stay in their storage (bf16) dtype; the MXU accumulates in f32.
    pre = jnp.dot(xc_ref[...], we_ref[...], preferred_element_type=jnp.float32)
    pre = pre + be_ref[...].astype(jnp.float32)
    acts_f32 = jnp.maximum(pre, 0.0)                       # (bm, tn) f32

    acts_out = acts_f32.astype(acts_ref.dtype)
    acts_ref[...] = acts_out
    # L1 partial from the materialized acts dtype (matches reference acts.float().abs());
    # row-reduce only -> lane-dense (1, tn) output; cross-lane/tile sums happen in JAX.
    l1p_ref[...] = jnp.sum(jnp.abs(acts_out.astype(jnp.float32)), axis=0,
                           keepdims=True).reshape(l1p_ref.shape)

    # Decoder K-reduction: acc += acts @ W_dec[k_tile, :]  (f32 accumulator in VMEM).
    acc_ref[...] += jnp.dot(acts_f32.astype(wd_ref.dtype), wd_ref[...],
                            preferred_element_type=jnp.float32)

    @pl.when(k == pl.num_programs(1) - 1)
    def _():
        xr = (acc_ref[...] + bd_ref[...].astype(jnp.float32)).astype(xr_ref.dtype)
        xr_ref[...] = xr
        # L2 partial from the materialized x_reconstruct dtype (matches reference).
        diff = xr.astype(jnp.float32) - x_ref[...].astype(jnp.float32)
        l2p_ref[...] = jnp.sum(diff * diff, axis=0, keepdims=True).reshape(l2p_ref.shape)


# --------------------------- per-generation defaults ------------------------
def _device_generation():
    try:
        kind = jax.devices()[0].device_kind.lower()
    except Exception:
        return "unknown"
    if "v7" in kind or "tpu7" in kind:
        return "v7x"
    if "v6" in kind:
        return "v6e"
    if "v5" in kind:
        return "v5"
    if any(t in kind for t in ("v2", "v3", "v4")):
        return "old"
    return "unknown"


# (bm_target, tn_target, weight_buffer_count) per generation.
#  - v6e: 128 MiB VMEM, 918 TF/s vs ~1.4 TB/s -> needs big bm (>~656 flop/B) + deep buffers.
#  - v5e: 820 GB/s HBM -> ~240 flop/B crossover; bm=512 is plenty, VMEM is roomy.
#  - v7x: 64 MiB VMEM (48 scoped) -> smaller hidden tile, no extra buffering; bm also
#         capped to B//2 so both TensorCores get a batch tile.
_GEN_DEFAULTS = {
    "v7x":     (512, 256, None),
    "v6e":     (1024, 1024, 3),
    "v5":      (512, 512, 3),
    "old":     (256, 512, None),
    "unknown": (512, 512, None),
}


def _sublane_min(*dtypes):
    m = 8
    for dt in dtypes:
        m = max(m, {4: 8, 2: 16, 1: 32}.get(jnp.dtype(dt).itemsize, 8))
    return m


def _vmem_limit_bytes():
    """Explicit scoped-VMEM budget: ~3/4 of physical, capped at 100 MiB
    (v5e/v6e: 96 MiB of 128; v7x: 48 MiB of 64)."""
    try:
        cap = int(pltpu.get_tpu_info().vmem_capacity_bytes)
    except Exception:
        cap = 64 * 1024 * 1024
    return int(min(cap - cap // 4, 100 * 1024 * 1024))


def _largest_tile(total, target, quantum):
    """Largest multiple of `quantum` <= min(target, total) that divides `total`
    (falls back to `total`, which is always a legal full-extent block)."""
    t = (min(target, total) // quantum) * quantum
    while t >= quantum:
        if total % t == 0:
            return t
        t -= quantum
    return total


def _vmem_bytes(bm, tn, d_mlp, x_isz, c_isz, p_isz, wbuf):
    """Per-step VMEM footprint of all pipelined blocks + scratch (bytes)."""
    b = 0
    b += 2 * bm * d_mlp * x_isz            # x input blocks (double-buffered)
    b += wbuf * d_mlp * tn * c_isz         # W_enc slabs
    b += wbuf * tn * d_mlp * c_isz         # W_dec slabs
    b += 2 * (tn + d_mlp) * p_isz          # b_enc / b_dec blocks
    b += 2 * bm * d_mlp * x_isz            # x_reconstruct output blocks
    b += 2 * bm * tn * x_isz               # acts output blocks
    b += 2 * (d_mlp + tn) * 4              # loss-partial output blocks
    b += bm * d_mlp * c_isz                # centred-x scratch
    b += bm * d_mlp * 4                    # f32 decoder accumulator
    return b


# ------------------------------ wrapper -------------------------------------
def autoencoder_forward(x, W_enc, b_enc, W_dec, b_dec, *, l1_coeff,
                        bm=None, tn=None, compute_dtype=None,
                        weight_buffers=None, vmem_limit_bytes=None):
    B, d_mlp = x.shape
    d_mlp_w, d_hidden = W_enc.shape
    assert d_mlp_w == d_mlp and W_dec.shape == (d_hidden, d_mlp)
    assert b_enc.shape == (d_hidden,) and b_dec.shape == (d_mlp,)
    assert d_hidden % 128 == 0, "d_hidden must be a multiple of 128"
    # TODO(synk): no ragged-batch path; pad the batch (and correct the l2 mean) when
    # B is not divisible by the chosen bm.

    gen = _device_generation()
    bm_t, tn_t, wbuf_t = _GEN_DEFAULTS.get(gen, _GEN_DEFAULTS["unknown"])

    # bf16 matmuls with f32 accumulation by default: f32 on the MXU is multi-pass and
    # f32 weights double the dominant (re-streamed per batch tile) HBM traffic.
    if compute_dtype is None:
        compute_dtype = jnp.bfloat16
    compute_dtype = jnp.dtype(compute_dtype)
    x_isz = jnp.dtype(x.dtype).itemsize
    c_isz = compute_dtype.itemsize
    p_isz = jnp.dtype(b_enc.dtype).itemsize
    sub_min = _sublane_min(x.dtype, compute_dtype)

    # --- batch tile ---
    if bm is None:
        bm_target = bm_t
        if gen == "v7x" and B // 2 >= sub_min:
            # Keep >= 2 batch tiles so the second TensorCore has work on the
            # "parallel" batch axis.
            bm_target = min(bm_target, B // 2)
        bm = _largest_tile(B, bm_target, sub_min)
    assert B % bm == 0, f"batch {B} must be divisible by bm={bm}"
    assert bm == B or bm % sub_min == 0, (
        f"bm={bm} must be a multiple of {sub_min} for dtypes {x.dtype}/{compute_dtype}")

    # --- hidden tile ---
    if tn is None:
        tn = _largest_tile(d_hidden, tn_t, 128)
    assert d_hidden % tn == 0 and tn % 128 == 0, f"bad hidden tile tn={tn}"

    # --- weight buffering depth ---
    if weight_buffers is None:
        weight_buffers = wbuf_t
    if weight_buffers is not None and (weight_buffers <= 2 or d_hidden // tn < 3):
        weight_buffers = None                      # default double-buffering

    # --- VMEM budget: verify the actual blocks fit, shrink if not ---
    if vmem_limit_bytes is None:
        vmem_limit_bytes = _vmem_limit_bytes()
    budget = int(vmem_limit_bytes) - 4 * 1024 * 1024   # compiler-internal headroom

    def est(bm_, tn_, wb_):
        return _vmem_bytes(bm_, tn_, d_mlp, x_isz, c_isz, p_isz,
                           2 if wb_ is None else wb_)

    while est(bm, tn, weight_buffers) > budget:
        if weight_buffers is not None:
            weight_buffers = None
        elif tn >= 256 and (tn // 2) % 128 == 0:
            tn //= 2
        elif bm >= 2 * sub_min and (bm // 2) % sub_min == 0:
            bm //= 2
        else:
            break
    if est(bm, tn, weight_buffers) > budget:
        raise ValueError(
            f"SAE tiles do not fit VMEM budget ({budget} B): bm={bm}, tn={tn}, "
            f"d_mlp={d_mlp}; use a narrower compute_dtype or smaller tiles.")

    n_bt = B // bm                       # batch tiles
    n_ht = d_hidden // tn                # hidden tiles
    grid = (n_bt, n_ht)

    # One-time casts outside the kernel; the kernel then streams half-width weights per
    # batch tile.  (In production, keep the weights stored in bf16 to skip this copy.)
    W_enc_c = W_enc.astype(compute_dtype)
    W_dec_c = W_dec.astype(compute_dtype)
    b_enc2 = b_enc.reshape(1, d_hidden)
    b_dec2 = b_dec.reshape(1, d_mlp)

    out_shapes = (
        jax.ShapeDtypeStruct((B, d_mlp), x.dtype),               # x_reconstruct
        jax.ShapeDtypeStruct((B, d_hidden), x.dtype),            # acts
        jax.ShapeDtypeStruct((n_bt, 1, d_mlp), jnp.float32),     # l2 partials (row-reduced)
        jax.ShapeDtypeStruct((n_bt, 1, d_hidden), jnp.float32),  # l1 partials (row-reduced)
    )

    # Advisory cost so XLA schedules surrounding ops around a long-running custom call.
    weight_bytes = 2 * d_mlp * d_hidden * c_isz
    cost = pl.CostEstimate(
        flops=int(4 * B * d_mlp * d_hidden),
        transcendentals=0,
        bytes_accessed=int(n_bt * weight_bytes
                           + 2 * B * d_mlp * x_isz              # x in, x_reconstruct out
                           + B * d_hidden * x_isz               # acts out
                           + n_bt * (d_hidden + d_mlp) * 4      # loss partials
                           + (d_hidden + d_mlp) * p_isz))       # biases

    def w_spec(shape, index_map, buffers):
        if buffers is None:
            return pl.BlockSpec(shape, index_map)
        return pl.BlockSpec(shape, index_map, pipeline_mode=pl.Buffered(buffers))

    def run(wbuf):
        grid_spec = pltpu.PrefetchScalarGridSpec(
            num_scalar_prefetch=0,
            grid=grid,
            in_specs=[
                pl.BlockSpec((bm, d_mlp), lambda i, k: (i, 0)),        # x (resident over k)
                w_spec((d_mlp, tn), lambda i, k: (0, k), wbuf),        # W_enc slab
                pl.BlockSpec((1, tn), lambda i, k: (0, k)),            # b_enc slab
                w_spec((tn, d_mlp), lambda i, k: (k, 0), wbuf),        # W_dec slab
                pl.BlockSpec((1, d_mlp), lambda i, k: (0, 0)),         # b_dec
            ],
            out_specs=[
                pl.BlockSpec((bm, d_mlp), lambda i, k: (i, 0)),        # x_reconstruct
                pl.BlockSpec((bm, tn), lambda i, k: (i, k)),           # acts
                pl.BlockSpec((1, 1, d_mlp), lambda i, k: (i, 0, 0)),   # l2 partial
                pl.BlockSpec((1, 1, tn), lambda i, k: (i, 0, k)),      # l1 partial
            ],
            scratch_shapes=[
                pltpu.VMEM((bm, d_mlp), compute_dtype),                # centred x (hoisted)
                pltpu.VMEM((bm, d_mlp), jnp.float32),                  # decoder accumulator
            ],
        )
        return pl.pallas_call(
            _sae_kernel,
            out_shape=out_shapes,
            grid_spec=grid_spec,
            compiler_params=pltpu.CompilerParams(
                # batch axis parallel (megacore on v7x); hidden axis carries the accumulator.
                dimension_semantics=("parallel", "arbitrary"),
                vmem_limit_bytes=int(vmem_limit_bytes)),
            cost_estimate=cost,
        )(x, W_enc_c, b_enc2, W_dec_c, b_dec2)

    try:
        xr, acts, l2p, l1p = run(weight_buffers)
    except Exception:
        if weight_buffers is None:
            raise
        # Graceful fallback if Buffered(n) pipelining is rejected on this jax/libtpu:
        # re-run with default double-buffered weight slabs.
        xr, acts, l2p, l1p = run(None)

    # Finish the reductions in f32 in JAX (cheap, lane-dense inputs).
    l2 = jnp.sum(l2p) / jnp.float32(B)                # sum(-1).mean(0)
    l1 = jnp.float32(l1_coeff) * jnp.sum(l1p)
    loss = l2 + l1
    return loss, xr, acts, l2, l1


# ---------------- parameter init (deterministic, mirrors __init__ shapes) ---
def _kaiming_uniform(key, shape, dtype=jnp.float32):
    # torch.nn.init.kaiming_uniform_ default: gain = sqrt(2), fan_in = shape[1]
    fan_in = shape[1]
    bound = math.sqrt(2.0) * math.sqrt(3.0 / fan_in)
    return jax.random.uniform(key, shape, dtype, minval=-bound, maxval=bound)


def init_autoencoder_params(key, d_mlp, d_hidden, dtype=jnp.float32):
    k_enc, k_dec = jax.random.split(key)
    W_enc = _kaiming_uniform(k_enc, (d_mlp, d_hidden), dtype)
    W_dec = _kaiming_uniform(k_dec, (d_hidden, d_mlp), dtype)
    # W_dec rows normalized to unit norm (as in __init__)
    W_dec = W_dec / jnp.linalg.norm(W_dec, axis=-1, keepdims=True)
    b_enc = jnp.zeros((d_hidden,), dtype)
    b_dec = jnp.zeros((d_mlp,), dtype)
    return W_enc, b_enc, W_dec, b_dec


def reference_forward(x, W_enc, b_enc, W_dec, b_dec, l1_coeff):
    x_cent = x - b_dec
    acts = jax.nn.relu(x_cent @ W_enc + b_enc)
    xr = acts @ W_dec + b_dec
    l2 = jnp.mean(jnp.sum((xr.astype(jnp.float32) - x.astype(jnp.float32)) ** 2, -1), 0)
    l1 = l1_coeff * jnp.sum(jnp.abs(acts.astype(jnp.float32)))
    return l2 + l1, xr, acts, l2, l1


def _check(x, W_enc, b_enc, W_dec, b_dec, l1_coeff, *, atol, rtol,
           loss_atol=None, loss_rtol=None, **kw):
    if loss_atol is None:
        loss_atol = atol
    if loss_rtol is None:
        loss_rtol = rtol
    loss, xr, acts, l2, l1 = jax.block_until_ready(
        autoencoder_forward(x, W_enc, b_enc, W_dec, b_dec, l1_coeff=l1_coeff, **kw))
    rloss, rxr, racts, rl2, rl1 = reference_forward(x, W_enc, b_enc, W_dec, b_dec, l1_coeff)
    assert jnp.allclose(xr, rxr, atol=atol, rtol=rtol), "x_reconstruct mismatch"
    assert jnp.allclose(acts, racts, atol=atol, rtol=rtol), "acts mismatch"
    assert jnp.allclose(l2, rl2, atol=loss_atol, rtol=loss_rtol), "l2_loss mismatch"
    assert jnp.allclose(l1, rl1, atol=loss_atol, rtol=loss_rtol), "l1_loss mismatch"
    assert jnp.allclose(loss, rloss, atol=loss_atol, rtol=loss_rtol), "loss mismatch"


if __name__ == "__main__":
    # Small config consistent with AutoEncoderConfig: d_mlp, dict_mult -> d_hidden.
    batch = 256
    d_mlp = 128
    dict_mult = 4
    d_hidden = d_mlp * dict_mult        # 512
    l1_coeff = 3e-4

    key = jax.random.PRNGKey(0)
    k_x, k_p = jax.random.split(key)
    x = jax.random.normal(k_x, (batch, d_mlp), jnp.float32)
    W_enc, b_enc, W_dec, b_dec = init_autoencoder_params(k_p, d_mlp, d_hidden)

    # 1) Exact-dtype path (f32 matmuls, tight tolerances).
    _check(x, W_enc, b_enc, W_dec, b_dec, l1_coeff,
           compute_dtype=jnp.float32, atol=2e-3, rtol=2e-3, loss_atol=1e-2)

    # 2) Default perf path: bf16 weights / matmuls with f32 accumulation, per-generation
    #    bm / tn / VMEM budget (documented precision tradeoff -> looser tolerances).
    _check(x, W_enc, b_enc, W_dec, b_dec, l1_coeff,
           atol=0.15, rtol=0.05, loss_atol=2.0, loss_rtol=0.02)

    # 3) Forced multi-tile path: batch tiling + hidden K-reduction (+ Buffered(3) weight
    #    slabs on v5e/v6e, with graceful fallback), exact dtypes for tight comparison.
    _check(x, W_enc, b_enc, W_dec, b_dec, l1_coeff, bm=64, tn=128,
           compute_dtype=jnp.float32, atol=2e-3, rtol=2e-3, loss_atol=1e-2)

    print("KERNEL_OK")
</pallas_src>

<mosaic_0001>
module attributes {stable_mosaic.version = 11 : i64} {
  func.func @_sae_kernel(%arg0: i32, %arg1: i32, %arg2: memref<256x128xf32, #tpu.memory_space<vmem>>, %arg3: memref<128x512xf32, #tpu.memory_space<vmem>>, %arg4: memref<1x512xf32, #tpu.memory_space<vmem>>, %arg5: memref<512x128xf32, #tpu.memory_space<vmem>>, %arg6: memref<1x128xf32, #tpu.memory_space<vmem>>, %arg7: memref<256x128xf32, #tpu.memory_space<vmem>>, %arg8: memref<256x512xf32, #tpu.memory_space<vmem>>, %arg9: memref<1x1x128xf32, #tpu.memory_space<vmem>>, %arg10: memref<1x1x512xf32, #tpu.memory_space<vmem>>, %arg11: memref<256x128xf32, #tpu.memory_space<vmem>>, %arg12: memref<256x128xf32, #tpu.memory_space<vmem>>) attributes {dimension_semantics = [#tpu.dimension_semantics<parallel>, #tpu.dimension_semantics<arbitrary>], iteration_bounds = array<i64: 1, 1>, scalar_prefetch = 0 : i64, scratch_operands = 2 : i64, tpu.core_type = #tpu.core_type<tc>, window_params = [{transform_indices = @transform_0, window_bounds = array<i64: 256, 128>}, {transform_indices = @transform_1, window_bounds = array<i64: 128, 512>}, {transform_indices = @transform_2, window_bounds = array<i64: 1, 512>}, {transform_indices = @transform_3, window_bounds = array<i64: 512, 128>}, {pipeline_mode = #tpu.pipeline_mode<synchronous>, transform_indices = @transform_4, window_bounds = array<i64: 1, 128>}, {transform_indices = @transform_5, window_bounds = array<i64: 256, 128>}, {transform_indices = @transform_6, window_bounds = array<i64: 256, 512>}, {transform_indices = @transform_7, window_bounds = array<i64: 1, 1, 128>}, {transform_indices = @transform_8, window_bounds = array<i64: 1, 1, 512>}]} {
    %c0_i32 = arith.constant 0 : i32
    %0 = arith.cmpi eq, %arg1, %c0_i32 : i32
    %1 = arith.extui %0 : i1 to i32
    %c0_i32_0 = arith.constant 0 : i32
    %2 = arith.cmpi ne, %1, %c0_i32_0 : i32
    scf.if %2 {
      %cst_22 = arith.constant 0.000000e+00 : f32
      %25 = vector.broadcast %cst_22 : f32 to vector<256x128xf32>
      %c0_23 = arith.constant 0 : index
      %c0_24 = arith.constant 0 : index
      %26 = vector.load %arg12[%c0_23, %c0_24] : memref<256x128xf32, #tpu.memory_space<vmem>>, vector<256x128xf32>
      tpu.vector_store %arg12[%c0_23, %c0_24], %25 {strides = array<i32>} : memref<256x128xf32, #tpu.memory_space<vmem>>, vector<256x128xf32>,
      %c0_25 = arith.constant 0 : index
      %c0_26 = arith.constant 0 : index
      %27 = vector.load %arg2[%c0_25, %c0_26] : memref<256x128xf32, #tpu.memory_space<vmem>>, vector<256x128xf32>
      %c0_27 = arith.constant 0 : index
      %c0_28 = arith.constant 0 : index
      %28 = vector.load %arg6[%c0_27, %c0_28] : memref<1x128xf32, #tpu.memory_space<vmem>>, vector<1x128xf32>
      %29 = vector.broadcast %28 : vector<1x128xf32> to vector<256x128xf32>
      %30 = arith.subf %27, %29 : vector<256x128xf32>
      %c0_29 = arith.constant 0 : index
      %c0_30 = arith.constant 0 : index
      %31 = vector.load %arg11[%c0_29, %c0_30] : memref<256x128xf32, #tpu.memory_space<vmem>>, vector<256x128xf32>
      tpu.vector_store %arg11[%c0_29, %c0_30], %30 {strides = array<i32>} : memref<256x128xf32, #tpu.memory_space<vmem>>, vector<256x128xf32>,
    } else {
    }
    %c0 = arith.constant 0 : index
    %c0_1 = arith.constant 0 : index
    %3 = vector.load %arg11[%c0, %c0_1] : memref<256x128xf32, #tpu.memory_space<vmem>>, vector<256x128xf32>
    %c0_2 = arith.constant 0 : index
    %c0_3 = arith.constant 0 : index
    %4 = vector.load %arg3[%c0_2, %c0_3] : memref<128x512xf32, #tpu.memory_space<vmem>>, vector<128x512xf32>
    %cst = arith.constant dense<0.000000e+00> : vector<256x512xf32>
    %5 = tpu.matmul %3, %4, %cst {dimension_numbers = #tpu.dot_dimension_numbers<[1], [0], [0], [1], [0, 0, 1, 1], [], []>} : vector<256x128xf32>, vector<128x512xf32>, vector<256x512xf32> -> vector<256x512xf32>
    %c0_4 = arith.constant 0 : index
    %c0_5 = arith.constant 0 : index
    %6 = vector.load %arg4[%c0_4, %c0_5] : memref<1x512xf32, #tpu.memory_space<vmem>>, vector<1x512xf32>
    %7 = vector.broadcast %6 : vector<1x512xf32> to vector<256x512xf32>
    %8 = arith.addf %5, %7 : vector<256x512xf32>
    %cst_6 = arith.constant 0.000000e+00 : f32
    %9 = vector.broadcast %cst_6 : f32 to vector<256x512xf32>
    %10 = arith.maximumf %8, %9 : vector<256x512xf32>
    %c0_7 = arith.constant 0 : index
    %c0_8 = arith.constant 0 : index
    %11 = vector.load %arg8[%c0_7, %c0_8] : memref<256x512xf32, #tpu.memory_space<vmem>>, vector<256x512xf32>
    tpu.vector_store %arg8[%c0_7, %c0_8], %10 {strides = array<i32>} : memref<256x512xf32, #tpu.memory_space<vmem>>, vector<256x512xf32>,
    %12 = math.absf %10 : vector<256x512xf32>
    %cst_9 = arith.constant dense<0.000000e+00> : vector<512xf32>
    %13 = vector.multi_reduction <add>, %12, %cst_9 [0] : vector<256x512xf32> to vector<512xf32>
    %14 = vector.shape_cast %13 : vector<512xf32> to vector<1x512xf32>
    %15 = vector.shape_cast %14 : vector<1x512xf32> to vector<1x1x512xf32>
    %c0_10 = arith.constant 0 : index
    %c0_11 = arith.constant 0 : index
    %c0_12 = arith.constant 0 : index
    %16 = vector.load %arg10[%c0_10, %c0_11, %c0_12] : memref<1x1x512xf32, #tpu.memory_space<vmem>>, vector<1x1x512xf32>
    tpu.vector_store %arg10[%c0_10, %c0_11, %c0_12], %15 {strides = array<i32>} : memref<1x1x512xf32, #tpu.memory_space<vmem>>, vector<1x1x512xf32>,
    %c0_13 = arith.constant 0 : index
    %c0_14 = arith.constant 0 : index
    %17 = vector.load %arg12[%c0_13, %c0_14] : memref<256x128xf32, #tpu.memory_space<vmem>>, vector<256x128xf32>
    %c0_15 = arith.constant 0 : index
    %c0_16 = arith.constant 0 : index
    %18 = vector.load %arg5[%c0_15, %c0_16] : memref<512x128xf32, #tpu.memory_space<vmem>>, vector<512x128xf32>
    %cst_17 = arith.constant dense<0.000000e+00> : vector<256x128xf32>
    %19 = tpu.matmul %10, %18, %cst_17 {dimension_numbers = #tpu.dot_dimension_numbers<[1], [0], [0], [1], [0, 0, 1, 1], [], []>} : vector<256x512xf32>, vector<512x128xf32>, vector<256x128xf32> -> vector<256x128xf32>
    %20 = arith.addf %17, %19 : vector<256x128xf32>
    %c0_18 = arith.constant 0 : index
    %c0_19 = arith.constant 0 : index
    %21 = vector.load %arg12[%c0_18, %c0_19] : memref<256x128xf32, #tpu.memory_space<vmem>>, vector<256x128xf32>
    tpu.vector_store %arg12[%c0_18, %c0_19], %20 {strides = array<i32>} : memref<256x128xf32, #tpu.memory_space<vmem>>, vector<256x128xf32>,
    %c0_i32_20 = arith.constant 0 : i32
    %22 = arith.cmpi eq, %arg1, %c0_i32_20 : i32
    %23 = arith.extui %22 : i1 to i32
    %c0_i32_21 = arith.constant 0 : i32
    %24 = arith.cmpi ne, %23, %c0_i32_21 : i32
    scf.if %24 {
      %c0_22 = arith.constant 0 : index
      %c0_23 = arith.constant 0 : index
      %25 = vector.load %arg12[%c0_22, %c0_23] : memref<256x128xf32, #tpu.memory_space<vmem>>, vector<256x128xf32>
      %c0_24 = arith.constant 0 : index
      %c0_25 = arith.constant 0 : index
      %26 = vector.load %arg6[%c0_24, %c0_25] : memref<1x128xf32, #tpu.memory_space<vmem>>, vector<1x128xf32>
      %27 = vector.broadcast %26 : vector<1x128xf32> to vector<256x128xf32>
      %28 = arith.addf %25, %27 : vector<256x128xf32>
      %c0_26 = arith.constant 0 : index
      %c0_27 = arith.constant 0 : index
      %29 = vector.load %arg7[%c0_26, %c0_27] : memref<256x128xf32, #tpu.memory_space<vmem>>, vector<256x128xf32>
      tpu.vector_store %arg7[%c0_26, %c0_27], %28 {strides = array<i32>} : memref<256x128xf32, #tpu.memory_space<vmem>>, vector<256x128xf32>,
      %c0_28 = arith.constant 0 : index
      %c0_29 = arith.constant 0 : index
      %30 = vector.load %arg2[%c0_28, %c0_29] : memref<256x128xf32, #tpu.memory_space<vmem>>, vector<256x128xf32>
      %31 = arith.subf %28, %30 : vector<256x128xf32>
      %32 = arith.mulf %31, %31 : vector<256x128xf32>
      %cst_30 = arith.constant dense<0.000000e+00> : vector<128xf32>
      %33 = vector.multi_reduction <add>, %32, %cst_30 [0] : vector<256x128xf32> to vector<128xf32>
      %34 = vector.shape_cast %33 : vector<128xf32> to vector<1x128xf32>
      %35 = vector.shape_cast %34 : vector<1x128xf32> to vector<1x1x128xf32>
      %c0_31 = arith.constant 0 : index
      %c0_32 = arith.constant 0 : index
      %c0_33 = arith.constant 0 : index
      %36 = vector.load %arg9[%c0_31, %c0_32, %c0_33] : memref<1x1x128xf32, #tpu.memory_space<vmem>>, vector<1x1x128xf32>
      tpu.vector_store %arg9[%c0_31, %c0_32, %c0_33], %35 {strides = array<i32>} : memref<1x1x128xf32, #tpu.memory_space<vmem>>, vector<1x1x128xf32>,
    } else {
    }
    return
  }
  func.func @transform_0(%arg0: i32, %arg1: i32) -> (i32, i32) {
    %c0_i32 = arith.constant 0 : i32
    %c0_i32_0 = arith.constant 0 : i32
    return %arg0, %c0_i32 : i32, i32
  }
  func.func @transform_1(%arg0: i32, %arg1: i32) -> (i32, i32) {
    %c0_i32 = arith.constant 0 : i32
    %c0_i32_0 = arith.constant 0 : i32
    return %c0_i32, %arg1 : i32, i32
  }
  func.func @transform_2(%arg0: i32, %arg1: i32) -> (i32, i32) {
    %c0_i32 = arith.constant 0 : i32
    %c0_i32_0 = arith.constant 0 : i32
    return %c0_i32, %arg1 : i32, i32
  }
  func.func @transform_3(%arg0: i32, %arg1: i32) -> (i32, i32) {
    %c0_i32 = arith.constant 0 : i32
    %c0_i32_0 = arith.constant 0 : i32
    return %arg1, %c0_i32 : i32, i32
  }
  func.func @transform_4(%arg0: i32, %arg1: i32) -> (i32, i32) {
    %c0_i32 = arith.constant 0 : i32
    %c0_i32_0 = arith.constant 0 : i32
    %c0_i32_1 = arith.constant 0 : i32
    return %c0_i32, %c0_i32_0 : i32, i32
  }
  func.func @transform_5(%arg0: i32, %arg1: i32) -> (i32, i32) {
    %c0_i32 = arith.constant 0 : i32
    %c0_i32_0 = arith.constant 0 : i32
    return %arg0, %c0_i32 : i32, i32
  }
  func.func @transform_6(%arg0: i32, %arg1: i32) -> (i32, i32) {
    %c0_i32 = arith.constant 0 : i32
    return %arg0, %arg1 : i32, i32
  }
  func.func @transform_7(%arg0: i32, %arg1: i32) -> (i32, i32, i32) {
    %c0_i32 = arith.constant 0 : i32
    %c0_i32_0 = arith.constant 0 : i32
    %c0_i32_1 = arith.constant 0 : i32
    return %arg0, %c0_i32, %c0_i32_0 : i32, i32, i32
  }
  func.func @transform_8(%arg0: i32, %arg1: i32) -> (i32, i32, i32) {
    %c0_i32 = arith.constant 0 : i32
    %c0_i32_0 = arith.constant 0 : i32
    return %arg0, %c0_i32, %arg1 : i32, i32, i32
  }
}

</mosaic_0001>

<llo_original>
// kernel: tpu_custom_call.1
$region0: #{tpu_custom_call.1}
  #allocation0 [shape = 'u32[]', space=smem, size = 0x4, offset = 0x4, fixed_abs, tag = 'smem constant byte address 0x4 - core index']
  #allocation1 [shape = 'u32[144,128]{1,0:T(1,128)}', space=vmem, size = 0x12000, scoped, tag = 'internal scratch']
  #allocation2 [shape = 'f32[256,128]{1,0:T(8,128)}', space=vmem, size = 0x20000, scoped, tag = 'scratch operand']
  #allocation3 [shape = 'f32[256,128]{1,0:T(8,128)}', space=vmem, size = 0x20000, scoped, tag = 'scratch operand']
  %s0 = inlined_call_operand.hbm [shape: f32[256,128], index: 0, kind: input, shape index: {}]
  %s1 = inlined_call_operand.hbm [shape: f32[128,512], index: 1, kind: input, shape index: {}]
  %s2 = inlined_call_operand.vmem [shape: f32[1,512], index: 2, kind: input, shape index: {}]
  %s3 = inlined_call_operand.hbm [shape: f32[512,128], index: 3, kind: input, shape index: {}]
  %s4 = inlined_call_operand.vmem [shape: f32[1,128], index: 4, kind: input, shape index: {}]
  %s5 = inlined_call_operand.hbm [shape: f32[256,128], index: 5, kind: output, shape index: {0}]
  %s6 = inlined_call_operand.hbm [shape: f32[256,512], index: 6, kind: output, shape index: {1}]
  %s7 = inlined_call_operand.hbm [shape: f32[1,1,128], index: 7, kind: output, shape index: {2}]
  %s8 = inlined_call_operand.hbm [shape: f32[1,1,512], index: 8, kind: output, shape index: {3}]
  %9 = xla_tuple %s5, %s6, %s7, %s8
  %s10 = sld [smem:[#allocation0]]
  $region74: #{tpu_custom_call.1} parent=0
    _
  %s12 = ssub.s32 1, %s10
  %s13 = scalar_select 0, %s12, %s10
  $region1: #{tpu_custom_call.1} parent=0
    #allocation4 [shape = 'u8[131072]{0}', space=vmem, size = 0x20000, scoped, tag = 'input window, operand 0, single buffered']
    #allocation5 [shape = 's32[1]{0}', space=sflag, size = 0x4, scoped, tag = 'scoped memory for tpu_custom_call.1']
    #allocation6 [shape = 's32[1]{0}', space=sflag, size = 0x4, scoped, tag = 'scoped memory for tpu_custom_call.1']
    #allocation7 [shape = 'u8[262144]{0}', space=vmem, size = 0x40000, scoped, tag = 'input window, operand 1, single buffered']
    #allocation8 [shape = 's32[1]{0}', space=sflag, size = 0x4, scoped, tag = 'scoped memory for tpu_custom_call.1']
    #allocation9 [shape = 'u8[262144]{0}', space=vmem, size = 0x40000, scoped, tag = 'input window, operand 3, single buffered']
    #allocation10 [shape = 'u8[131072]{0}', space=vmem, size = 0x20000, scoped, tag = 'output window, operand 0, single buffered']
    #allocation11 [shape = 'u8[524288]{0}', space=vmem, size = 0x80000, scoped, tag = 'output window, operand 1, single buffered']
    #allocation12 [shape = 's32[1]{0}', space=sflag, size = 0x4, scoped, tag = 'scoped memory for tpu_custom_call.1']
    #allocation13 [shape = 'u8[512]{0}', space=vmem, size = 0x400, scoped, tag = 'output window, operand 2, single buffered']
    #allocation14 [shape = 'u8[2048]{0}', space=vmem, size = 0x800, scoped, tag = 'output window, operand 3, single buffered']
    #allocation15 [shape = 's32[1]{0}', space=sflag, size = 0x4, scoped, tag = 'scoped memory for tpu_custom_call.1']
    %14 = vsyncpa [#allocation5], 0
    %15 = vsyncpa [#allocation8], 0
    %16 = vsyncpa [#allocation6], 0
    %17 = vsyncpa [#allocation12], 0
    %18 = vsyncpa [#allocation15], 0
    // Predicated region
    $region2: #{tpu_custom_call.1} parent=1 // pred_check
      _
    $region3: #{tpu_custom_call.1} parent=1 // pred_check_branch
      %20 = sbr.rel (0) target = $region5
    $region4: #{tpu_custom_call.1} parent=1 // pred_region
      %s22 = ssub.s32 4096, 4096
      %23 = vsyncadd [#allocation5], %s22
      %s24 = sshll.u32 [#allocation4], 4
      %s25 = int_to_ptr.vmem [resolvable:$true] %s24
      %30 = dma.hbm_to_vmem [thread:$0]  %s0, 4096, %s25, [#allocation5], 128, 128, 8
    $region5: #{tpu_custom_call.1} parent=1 // pred_fallthru
      _
    // Predicated region
    $region6: #{tpu_custom_call.1} parent=1 // pred_check
      _
    $region7: #{tpu_custom_call.1} parent=1 // pred_check_branch
      %32 = sbr.rel (0) target = $region9
    $region8: #{tpu_custom_call.1} parent=1 // pred_region
      %s34 = ssub.s32 8192, 8192
      %35 = vsyncadd [#allocation8], %s34
      %s36 = sshll.u32 [#allocation7], 4
      %s37 = int_to_ptr.vmem [resolvable:$true] %s36
      %42 = dma.hbm_to_vmem [thread:$0]  %s1, 8192, %s37, [#allocation8], 512, 512, 32
    $region9: #{tpu_custom_call.1} parent=1 // pred_fallthru
      _
    // Predicated region
    $region10: #{tpu_custom_call.1} parent=1 // pred_check
      _
    $region11: #{tpu_custom_call.1} parent=1 // pred_check_branch
      %44 = sbr.rel (0) target = $region13
    $region12: #{tpu_custom_call.1} parent=1 // pred_region
      _
    $region13: #{tpu_custom_call.1} parent=1 // pred_fallthru
      _
    // Predicated region
    $region14: #{tpu_custom_call.1} parent=1 // pred_check
      _
    $region15: #{tpu_custom_call.1} parent=1 // pred_check_branch
      %46 = sbr.rel (0) target = $region17
    $region16: #{tpu_custom_call.1} parent=1 // pred_region
      %s48 = ssub.s32 8192, 8192
      %49 = vsyncadd [#allocation8], %s48
      %s50 = sshll.u32 [#allocation9], 4
      %s51 = int_to_ptr.vmem [resolvable:$true] %s50
      %56 = dma.hbm_to_vmem [thread:$0]  %s3, 8192, %s51, [#allocation8], 128, 128, 8
    $region17: #{tpu_custom_call.1} parent=1 // pred_fallthru
      _
    // Predicated region
    $region18: #{tpu_custom_call.1} parent=1 // pred_check
      _
    $region19: #{tpu_custom_call.1} parent=1 // pred_check_branch
      %58 = sbr.rel (0) target = $region21
    $region20: #{tpu_custom_call.1} parent=1 // pred_region
      _
    $region21: #{tpu_custom_call.1} parent=1 // pred_fallthru
      _
    // Predicated region
    $region22: #{tpu_custom_call.1} parent=1 // pred_check
      _
    $region23: #{tpu_custom_call.1} parent=1 // pred_check_branch
      %60 = sbr.rel (0) target = $region25
    $region24: #{tpu_custom_call.1} parent=1 // pred_region
      %61 = dma.done [#allocation5], 4096
    $region25: #{tpu_custom_call.1} parent=1 // pred_fallthru
      _
    // Predicated region
    $region26: #{tpu_custom_call.1} parent=1 // pred_check
      _
    $region27: #{tpu_custom_call.1} parent=1 // pred_check_branch
      %63 = sbr.rel (0) target = $region29
    $region28: #{tpu_custom_call.1} parent=1 // pred_region
      %64 = dma.done [#allocation8], 8192
    $region29: #{tpu_custom_call.1} parent=1 // pred_fallthru
      _
    // Predicated region
    $region30: #{tpu_custom_call.1} parent=1 // pred_check
      _
    $region31: #{tpu_custom_call.1} parent=1 // pred_check_branch
      %66 = sbr.rel (0) target = $region33
    $region32: #{tpu_custom_call.1} parent=1 // pred_region
      %67 = dma.done [#allocation8], 8192
    $region33: #{tpu_custom_call.1} parent=1 // pred_fallthru
      _
    %p68 = scmp.eq.s32.totalorder 0, 0
    // Predicated region
    $region34: #{tpu_custom_call.1} parent=1 // pred_check
      %p69 = pneg %p68
    $region35: #{tpu_custom_call.1} parent=1 // pred_check_branch
      %71 = sbr.rel (%p69) target = $region37
    $region36: #{tpu_custom_call.1} parent=1 // pred_region
      %72 = vst [vmem:[#allocation3] sm:$0xff] 0.0
      %73 = vst [vmem:[#allocation3 + $0x8] sm:$0xff] 0.0
      %74 = vst [vmem:[#allocation3 + $0x10] sm:$0xff] 0.0
      %75 = vst [vmem:[#allocation3 + $0x18] sm:$0xff] 0.0
      %76 = vst [vmem:[#allocation3 + $0x20] sm:$0xff] 0.0
      %77 = vst [vmem:[#allocation3 + $0x28] sm:$0xff] 0.0
      %78 = vst [vmem:[#allocation3 + $0x30] sm:$0xff] 0.0
      %79 = vst [vmem:[#allocation3 + $0x38] sm:$0xff] 0.0
      %80 = vst [vmem:[#allocation3 + $0x40] sm:$0xff] 0.0
      %81 = vst [vmem:[#allocation3 + $0x48] sm:$0xff] 0.0
      %82 = vst [vmem:[#allocation3 + $0x50] sm:$0xff] 0.0
      %83 = vst [vmem:[#allocation3 + $0x58] sm:$0xff] 0.0
      %84 = vst [vmem:[#allocation3 + $0x60] sm:$0xff] 0.0
      %85 = vst [vmem:[#allocation3 + $0x68] sm:$0xff] 0.0
      %86 = vst [vmem:[#allocation3 + $0x70] sm:$0xff] 0.0
      %87 = vst [vmem:[#allocation3 + $0x78] sm:$0xff] 0.0
      %88 = vst [vmem:[#allocation3 + $0x80] sm:$0xff] 0.0
      %89 = vst [vmem:[#allocation3 + $0x88] sm:$0xff] 0.0
      %90 = vst [vmem:[#allocation3 + $0x90] sm:$0xff] 0.0
      %91 = vst [vmem:[#allocation3 + $0x98] sm:$0xff] 0.0
      %92 = vst [vmem:[#allocation3 + $0xa0] sm:$0xff] 0.0
      %93 = vst [vmem:[#allocation3 + $0xa8] sm:$0xff] 0.0
      %94 = vst [vmem:[#allocation3 + $0xb0] sm:$0xff] 0.0
      %95 = vst [vmem:[#allocation3 + $0xb8] sm:$0xff] 0.0
      %96 = vst [vmem:[#allocation3 + $0xc0] sm:$0xff] 0.0
      %97 = vst [vmem:[#allocation3 + $0xc8] sm:$0xff] 0.0
      %98 = vst [vmem:[#allocation3 + $0xd0] sm:$0xff] 0.0
      %99 = vst [vmem:[#allocation3 + $0xd8] sm:$0xff] 0.0
      %100 = vst [vmem:[#allocation3 + $0xe0] sm:$0xff] 0.0
      %101 = vst [vmem:[#allocation3 + $0xe8] sm:$0xff] 0.0
      %102 = vst [vmem:[#allocation3 + $0xf0] sm:$0xff] 0.0
      %103 = vst [vmem:[#allocation3 + $0xf8] sm:$0xff] 0.0
      %v104 = vld [vmem:[#allocation4] sm:$0xff]
      %v105 = vld [vmem:[#allocation4 + $0x8] sm:$0xff]
      %v106 = vld [vmem:[#allocation4 + $0x10] sm:$0xff]
      %v107 = vld [vmem:[#allocation4 + $0x18] sm:$0xff]
      %v108 = vld [vmem:[#allocation4 + $0x20] sm:$0xff]
      %v109 = vld [vmem:[#allocation4 + $0x28] sm:$0xff]
      %v110 = vld [vmem:[#allocation4 + $0x30] sm:$0xff]
      %v111 = vld [vmem:[#allocation4 + $0x38] sm:$0xff]
      %v112 = vld [vmem:[#allocation4 + $0x40] sm:$0xff]
      %v113 = vld [vmem:[#allocation4 + $0x48] sm:$0xff]
      %v114 = vld [vmem:[#allocation4 + $0x50] sm:$0xff]
      %v115 = vld [vmem:[#allocation4 + $0x58] sm:$0xff]
      %v116 = vld [vmem:[#allocation4 + $0x60] sm:$0xff]
      %v117 = vld [vmem:[#allocation4 + $0x68] sm:$0xff]
      %v118 = vld [vmem:[#allocation4 + $0x70] sm:$0xff]
      %v119 = vld [vmem:[#allocation4 + $0x78] sm:$0xff]
      %v120 = vld [vmem:[#allocation4 + $0x80] sm:$0xff]
      %v121 = vld [vmem:[#allocation4 + $0x88] sm:$0xff]
      %v122 = vld [vmem:[#allocation4 + $0x90] sm:$0xff]
      %v123 = vld [vmem:[#allocation4 + $0x98] sm:$0xff]
      %v124 = vld [vmem:[#allocation4 + $0xa0] sm:$0xff]
      %v125 = vld [vmem:[#allocation4 + $0xa8] sm:$0xff]
      %v126 = vld [vmem:[#allocation4 + $0xb0] sm:$0xff]
      %v127 = vld [vmem:[#allocation4 + $0xb8] sm:$0xff]
      %v128 = vld [vmem:[#allocation4 + $0xc0] sm:$0xff]
      %v129 = vld [vmem:[#allocation4 + $0xc8] sm:$0xff]
      %v130 = vld [vmem:[#allocation4 + $0xd0] sm:$0xff]
      %v131 = vld [vmem:[#allocation4 + $0xd8] sm:$0xff]
      %v132 = vld [vmem:[#allocation4 + $0xe0] sm:$0xff]
      %v133 = vld [vmem:[#allocation4 + $0xe8] sm:$0xff]
      %v134 = vld [vmem:[#allocation4 + $0xf0] sm:$0xff]
      %v135 = vld [vmem:[#allocation4 + $0xf8] sm:$0xff]
      %v136 = vld [vmem:[%s4] sm:$0x1]
      %v138 = vlaneseq
      %v139 = vshrl.u32 %v138, 7
      %v140 = vsub.s32 0, %v139
      %v141 = vrot.slane %v136, %v140
      %v143 = vsub.f32 %v104, %v141
      %v144 = vsub.f32 %v105, %v141
      %v145 = vsub.f32 %v106, %v141
      %v146 = vsub.f32 %v107, %v141
      %v147 = vsub.f32 %v108, %v141
      %v148 = vsub.f32 %v109, %v141
      %v149 = vsub.f32 %v110, %v141
      %v150 = vsub.f32 %v111, %v141
      %v151 = vsub.f32 %v112, %v141
      %v152 = vsub.f32 %v113, %v141
      %v153 = vsub.f32 %v114, %v141
      %v154 = vsub.f32 %v115, %v141
      %v155 = vsub.f32 %v116, %v141
      %v156 = vsub.f32 %v117, %v141
      %v157 = vsub.f32 %v118, %v141
      %v158 = vsub.f32 %v119, %v141
      %v159 = vsub.f32 %v120, %v141
      %v160 = vsub.f32 %v121, %v141
      %v161 = vsub.f32 %v122, %v141
      %v162 = vsub.f32 %v123, %v141
      %v163 = vsub.f32 %v124, %v141
      %v164 = vsub.f32 %v125, %v141
      %v165 = vsub.f32 %v126, %v141
      %v166 = vsub.f32 %v127, %v141
      %v167 = vsub.f32 %v128, %v141
      %v168 = vsub.f32 %v129, %v141
      %v169 = vsub.f32 %v130, %v141
      %v170 = vsub.f32 %v131, %v141
      %v171 = vsub.f32 %v132, %v141
      %v172 = vsub.f32 %v133, %v141
      %v173 = vsub.f32 %v134, %v141
      %v174 = vsub.f32 %v135, %v141
      %175 = vst [vmem:[#allocation2] sm:$0xff] %v143
      %176 = vst [vmem:[#allocation2 + $0x8] sm:$0xff] %v144
      %177 = vst [vmem:[#allocation2 + $0x10] sm:$0xff] %v145
      %178 = vst [vmem:[#allocation2 + $0x18] sm:$0xff] %v146
      %179 = vst [vmem:[#allocation2 + $0x20] sm:$0xff] %v147
      %180 = vst [vmem:[#allocation2 + $0x28] sm:$0xff] %v148
      %181 = vst [vmem:[#allocation2 + $0x30] sm:$0xff] %v149
      %182 = vst [vmem:[#allocation2 + $0x38] sm:$0xff] %v150
      %183 = vst [vmem:[#allocation2 + $0x40] sm:$0xff] %v151
      %184 = vst [vmem:[#allocation2 + $0x48] sm:$0xff] %v152
      %185 = vst [vmem:[#allocation2 + $0x50] sm:$0xff] %v153
      %186 = vst [vmem:[#allocation2 + $0x58] sm:$0xff] %v154
      %187 = vst [vmem:[#allocation2 + $0x60] sm:$0xff] %v155
      %188 = vst [vmem:[#allocation2 + $0x68] sm:$0xff] %v156
      %189 = vst [vmem:[#allocation2 + $0x70] sm:$0xff] %v157
      %190 = vst [vmem:[#allocation2 + $0x78] sm:$0xff] %v158
      %191 = vst [vmem:[#allocation2 + $0x80] sm:$0xff] %v159
      %192 = vst [vmem:[#allocation2 + $0x88] sm:$0xff] %v160
      %193 = vst [vmem:[#allocation2 + $0x90] sm:$0xff] %v161
      %194 = vst [vmem:[#allocation2 + $0x98] sm:$0xff] %v162
      %195 = vst [vmem:[#allocation2 + $0xa0] sm:$0xff] %v163
      %196 = vst [vmem:[#allocation2 + $0xa8] sm:$0xff] %v164
      %197 = vst [vmem:[#allocation2 + $0xb0] sm:$0xff] %v165
      %198 = vst [vmem:[#allocation2 + $0xb8] sm:$0xff] %v166
      %199 = vst [vmem:[#allocation2 + $0xc0] sm:$0xff] %v167
      %200 = vst [vmem:[#allocation2 + $0xc8] sm:$0xff] %v168
      %201 = vst [vmem:[#allocation2 + $0xd0] sm:$0xff] %v169
      %202 = vst [vmem:[#allocation2 + $0xd8] sm:$0xff] %v170
      %203 = vst [vmem:[#allocation2 + $0xe0] sm:$0xff] %v171
      %204 = vst [vmem:[#allocation2 + $0xe8] sm:$0xff] %v172
      %205 = vst [vmem:[#allocation2 + $0xf0] sm:$0xff] %v173
      %206 = vst [vmem:[#allocation2 + $0xf8] sm:$0xff] %v174
    $region37: #{tpu_custom_call.1} parent=1 // pred_fallthru
      _
    %v207 = vld [vmem:[#allocation2] sm:$0xff]
    %v208 = vld [vmem:[#allocation2 + $0x8] sm:$0xff]
    %v209 = vld [vmem:[#allocation2 + $0x10] sm:$0xff]
    %v210 = vld [vmem:[#allocation2 + $0x18] sm:$0xff]
    %v211 = vld [vmem:[#allocation2 + $0x20] sm:$0xff]
    %v212 = vld [vmem:[#allocation2 + $0x28] sm:$0xff]
    %v213 = vld [vmem:[#allocation2 + $0x30] sm:$0xff]
    %v214 = vld [vmem:[#allocation2 + $0x38] sm:$0xff]
    %v215 = vld [vmem:[#allocation2 + $0x40] sm:$0xff]
    %v216 = vld [vmem:[#allocation2 + $0x48] sm:$0xff]
    %v217 = vld [vmem:[#allocation2 + $0x50] sm:$0xff]
    %v218 = vld [vmem:[#allocation2 + $0x58] sm:$0xff]
    %v219 = vld [vmem:[#allocation2 + $0x60] sm:$0xff]
    %v220 = vld [vmem:[#allocation2 + $0x68] sm:$0xff]
    %v221 = vld [vmem:[#allocation2 + $0x70] sm:$0xff]
    %v222 = vld [vmem:[#allocation2 + $0x78] sm:$0xff]
    %v223 = vld [vmem:[#allocation2 + $0x80] sm:$0xff]
    %v224 = vld [vmem:[#allocation2 + $0x88] sm:$0xff]
    %v225 = vld [vmem:[#allocation2 + $0x90] sm:$0xff]
    %v226 = vld [vmem:[#allocation2 + $0x98] sm:$0xff]
    %v227 = vld [vmem:[#allocation2 + $0xa0] sm:$0xff]
    %v228 = vld [vmem:[#allocation2 + $0xa8] sm:$0xff]
    %v229 = vld [vmem:[#allocation2 + $0xb0] sm:$0xff]
    %v230 = vld [vmem:[#allocation2 + $0xb8] sm:$0xff]
    %v231 = vld [vmem:[#allocation2 + $0xc0] sm:$0xff]
    %v232 = vld [vmem:[#allocation2 + $0xc8] sm:$0xff]
    %v233 = vld [vmem:[#allocation2 + $0xd0] sm:$0xff]
    %v234 = vld [vmem:[#allocation2 + $0xd8] sm:$0xff]
    %v235 = vld [vmem:[#allocation2 + $0xe0] sm:$0xff]
    %v236 = vld [vmem:[#allocation2 + $0xe8] sm:$0xff]
    %v237 = vld [vmem:[#allocation2 + $0xf0] sm:$0xff]
    %v238 = vld [vmem:[#allocation2 + $0xf8] sm:$0xff]
    %v239 = vld [vmem:[#allocation7] sm:$0xff]
    %v240 = vld [vmem:[#allocation7 + $0x8] sm:$0xff]
    %v241 = vld [vmem:[#allocation7 + $0x10] sm:$0xff]
    %v242 = vld [vmem:[#allocation7 + $0x18] sm:$0xff]
    %v243 = vld [vmem:[#allocation7 + $0x20] sm:$0xff]
    %v244 = vld [vmem:[#allocation7 + $0x28] sm:$0xff]
    %v245 = vld [vmem:[#allocation7 + $0x30] sm:$0xff]
    %v246 = vld [vmem:[#allocation7 + $0x38] sm:$0xff]
    %v247 = vld [vmem:[#allocation7 + $0x40] sm:$0xff]
    %v248 = vld [vmem:[#allocation7 + $0x48] sm:$0xff]
    %v249 = vld [vmem:[#allocation7 + $0x50] sm:$0xff]
    %v250 = vld [vmem:[#allocation7 + $0x58] sm:$0xff]
    %v251 = vld [vmem:[#allocation7 + $0x60] sm:$0xff]
    %v252 = vld [vmem:[#allocation7 + $0x68] sm:$0xff]
    %v253 = vld [vmem:[#allocation7 + $0x70] sm:$0xff]
    %v254 = vld [vmem:[#allocation7 + $0x78] sm:$0xff]
    %v255 = vld [vmem:[#allocation7 + $0x80] sm:$0xff]
    %v256 = vld [vmem:[#allocation7 + $0x88] sm:$0xff]
    %v257 = vld [vmem:[#allocation7 + $0x90] sm:$0xff]
    %v258 = vld [vmem:[#allocation7 + $0x98] sm:$0xff]
    %v259 = vld [vmem:[#allocation7 + $0xa0] sm:$0xff]
    %v260 = vld [vmem:[#allocation7 + $0xa8] sm:$0xff]
    %v261 = vld [vmem:[#allocation7 + $0xb0] sm:$0xff]
    %v262 = vld [vmem:[#allocation7 + $0xb8] sm:$0xff]
    %v263 = vld [vmem:[#allocation7 + $0xc0] sm:$0xff]
    %v264 = vld [vmem:[#allocation7 + $0xc8] sm:$0xff]
    %v265 = vld [vmem:[#allocation7 + $0xd0] sm:$0xff]
    %v266 = vld [vmem:[#allocation7 + $0xd8] sm:$0xff]
    %v267 = vld [vmem:[#allocation7 + $0xe0] sm:$0xff]
    %v268 = vld [vmem:[#allocation7 + $0xe8] sm:$0xff]
    %v269 = vld [vmem:[#allocation7 + $0xf0] sm:$0xff]
    %v270 = vld [vmem:[#allocation7 + $0xf8] sm:$0xff]
    %v271 = vld [vmem:[#allocation7 + $0x100] sm:$0xff]
    %v272 = vld [vmem:[#allocation7 + $0x108] sm:$0xff]
    %v273 = vld [vmem:[#allocation7 + $0x110] sm:$0xff]
    %v274 = vld [vmem:[#allocation7 + $0x118] sm:$0xff]
    %v275 = vld [vmem:[#allocation7 + $0x120] sm:$0xff]
    %v276 = vld [vmem:[#allocation7 + $0x128] sm:$0xff]
    %v277 = vld [vmem:[#allocation7 + $0x130] sm:$0xff]
    %v278 = vld [vmem:[#allocation7 + $0x138] sm:$0xff]
    %v279 = vld [vmem:[#allocation7 + $0x140] sm:$0xff]
    %v280 = vld [vmem:[#allocation7 + $0x148] sm:$0xff]
    %v281 = vld [vmem:[#allocation7 + $0x150] sm:$0xff]
    %v282 = vld [vmem:[#allocation7 + $0x158] sm:$0xff]
    %v283 = vld [vmem:[#allocation7 + $0x160] sm:$0xff]
    %v284 = vld [vmem:[#allocation7 + $0x168] sm:$0xff]
    %v285 = vld [vmem:[#allocation7 + $0x170] sm:$0xff]
    %v286 = vld [vmem:[#allocation7 + $0x178] sm:$0xff]
    %v287 = vld [vmem:[#allocation7 + $0x180] sm:$0xff]
    %v288 = vld [vmem:[#allocation7 + $0x188] sm:$0xff]
    %v289 = vld [vmem:[#allocation7 + $0x190] sm:$0xff]
    %v290 = vld [vmem:[#allocation7 + $0x198] sm:$0xff]
    %v291 = vld [vmem:[#allocation7 + $0x1a0] sm:$0xff]
    %v292 = vld [vmem:[#allocation7 + $0x1a8] sm:$0xff]
    %v293 = vld [vmem:[#allocation7 + $0x1b0] sm:$0xff]
    %v294 = vld [vmem:[#allocation7 + $0x1b8] sm:$0xff]
    %v295 = vld [vmem:[#allocation7 + $0x1c0] sm:$0xff]
    %v296 = vld [vmem:[#allocation7 + $0x1c8] sm:$0xff]
    %v297 = vld [vmem:[#allocation7 + $0x1d0] sm:$0xff]
    %v298 = vld [vmem:[#allocation7 + $0x1d8] sm:$0xff]
    %v299 = vld [vmem:[#allocation7 + $0x1e0] sm:$0xff]
    %v300 = vld [vmem:[#allocation7 + $0x1e8] sm:$0xff]
    %v301 = vld [vmem:[#allocation7 + $0x1f0] sm:$0xff]
    %v302 = vld [vmem:[#allocation7 + $0x1f8] sm:$0xff]
    %v303 = vld [vmem:[%s2] sm:$0xf]
    %v305 = vlaneseq
    %v306 = vshrl.u32 %v305, 7
    %v307 = vsub.s32 0, %v306
    %v308 = vrot.slane %v303, %v307
    %v309 = vlaneseq
    %v310 = vshrl.u32 %v309, 7
    %v311 = vsub.s32 1, %v310
    %v312 = vrot.slane %v303, %v311
    %v313 = vlaneseq
    %v314 = vshrl.u32 %v313, 7
    %v315 = vsub.s32 2, %v314
    %v316 = vrot.slane %v303, %v315
    %v317 = vlaneseq
    %v318 = vshrl.u32 %v317, 7
    %v319 = vsub.s32 3, %v318
    %v320 = vrot.slane %v303, %v319
    %325 = vmatprep.subr.mxu0 %v240
    %326 = vmatpush1.msra.mxu0 %v239
    %327 = vmatprep.subr.mxu0 %v244
    %328 = vmatpush1.msra.mxu0 %v243
    %329 = vmatprep.subr.mxu0 %v248
    %330 = vmatpush1.msra.mxu0 %v247
    %331 = vmatprep.subr.mxu0 %v252
    %332 = vmatpush1.msra.mxu0 %v251
    %333 = vmatprep.subr.mxu0 %v256
    %334 = vmatpush1.msra.mxu0 %v255
    %335 = vmatprep.subr.mxu0 %v260
    %336 = vmatpush1.msra.mxu0 %v259
    %337 = vmatprep.subr.mxu0 %v264
    %338 = vmatpush1.msra.mxu0 %v263
    %339 = vmatprep.subr.mxu0 %v268
    %340 = vmatpush1.msra.mxu0 %v267
    %341 = vmatprep.subr.mxu0 %v272
    %342 = vmatpush1.msra.mxu0 %v271
    %343 = vmatprep.subr.mxu0 %v276
    %344 = vmatpush1.msra.mxu0 %v275
    %345 = vmatprep.subr.mxu0 %v280
    %346 = vmatpush1.msra.mxu0 %v279
    %347 = vmatprep.subr.mxu0 %v284
    %348 = vmatpush1.msra.mxu0 %v283
    %349 = vmatprep.subr.mxu0 %v288
    %350 = vmatpush1.msra.mxu0 %v287
    %351 = vmatprep.subr.mxu0 %v292
    %352 = vmatpush1.msra.mxu0 %v291
    %353 = vmatprep.subr.mxu0 %v296
    %354 = vmatpush1.msra.mxu0 %v295
    %355 = vmatprep.subr.mxu0 %v300
    %356 = vmatpush1.msra.mxu0 %v299
    %357 = vmatprep.subr.mxu0 0.0
    %358 = vmatpush1.msra.mxu0 0.0
    %359 = vmatprep.subr.mxu0 0.0
    %360 = vmatpush1.msra.mxu0 0.0
    %361 = vmatprep.subr.mxu0 0.0
    %362 = vmatpush1.msra.mxu0 0.0
    %363 = vmatprep.subr.mxu0 0.0
    %364 = vmatpush1.msra.mxu0 0.0
    %365 = vmatprep.subr.mxu0 0.0
    %366 = vmatpush1.msra.mxu0 0.0
    %367 = vmatprep.subr.mxu0 0.0
    %368 = vmatpush1.msra.mxu0 0.0
    %369 = vmatprep.subr.mxu0 0.0
    %370 = vmatpush1.msra.mxu0 0.0
    %371 = vmatprep.subr.mxu0 0.0
    %372 = vmatpush1.msra.mxu0 0.0
    %373 = vmatprep.subr.mxu0 0.0
    %374 = vmatpush1.msra.mxu0 0.0
    %375 = vmatprep.subr.mxu0 0.0
    %376 = vmatpush1.msra.mxu0 0.0
    %377 = vmatprep.subr.mxu0 0.0
    %378 = vmatpush1.msra.mxu0 0.0
    %379 = vmatprep.subr.mxu0 0.0
    %380 = vmatpush1.msra.mxu0 0.0
    %381 = vmatprep.subr.mxu0 0.0
    %382 = vmatpush1.msra.mxu0 0.0
    %383 = vmatprep.subr.mxu0 0.0
    %384 = vmatpush1.msra.mxu0 0.0
    %385 = vmatprep.subr.mxu0 0.0
    %386 = vmatpush1.msra.mxu0 0.0
    %387 = vmatprep.subr.mxu0 0.0
    %388 = vmatpush1.msra.mxu0 0.0
    %389 = vmatprep.mubr.f32.mxu0 0.0
    %390 = vmatmul.mubr.f32.gmra.mrb[0].mxu0 %v207
    %v391 = vpop.f32.mrb[0].mxu0
    %v392 = vadd.f32 %v308, %v391
    %v393 = vpop.f32.mrb[0].mxu0
    %v394 = vadd.f32 %v312, %v393
    %395 = vmatprep.mubr.f32.mxu0 0.0
    %396 = vmatmul.mubr.f32.gmra.mrb[0].mxu0 %v208
    %v397 = vpop.f32.mrb[0].mxu0
    %v398 = vadd.f32 %v308, %v397
    %v399 = vpop.f32.mrb[0].mxu0
    %v400 = vadd.f32 %v312, %v399
    %401 = vmatprep.mubr.f32.mxu0 0.0
    %402 = vmatmul.mubr.f32.gmra.mrb[0].mxu0 %v209
    %v403 = vpop.f32.mrb[0].mxu0
    %v404 = vadd.f32 %v308, %v403
    %v405 = vpop.f32.mrb[0].mxu0
    %v406 = vadd.f32 %v312, %v405
    %407 = vmatprep.mubr.f32.mxu0 0.0
    %408 = vmatmul.mubr.f32.gmra.mrb[0].mxu0 %v210
    %v409 = vpop.f32.mrb[0].mxu0
    %v410 = vadd.f32 %v308, %v409
    %v411 = vpop.f32.mrb[0].mxu0
    %v412 = vadd.f32 %v312, %v411
    %413 = vmatprep.mubr.f32.mxu0 0.0
    %414 = vmatmul.mubr.f32.gmra.mrb[0].mxu0 %v211
    %v415 = vpop.f32.mrb[0].mxu0
    %v416 = vadd.f32 %v308, %v415
    %v417 = vpop.f32.mrb[0].mxu0
    %v418 = vadd.f32 %v312, %v417
    %419 = vmatprep.mubr.f32.mxu0 0.0
    %420 = vmatmul.mubr.f32.gmra.mrb[0].mxu0 %v212
    %v421 = vpop.f32.mrb[0].mxu0
    %v422 = vadd.f32 %v308, %v421
    %v423 = vpop.f32.mrb[0].mxu0
    %v424 = vadd.f32 %v312, %v423
    %425 = vmatprep.mubr.f32.mxu0 0.0
    %426 = vmatmul.mubr.f32.gmra.mrb[0].mxu0 %v213
    %v427 = vpop.f32.mrb[0].mxu0
    %v428 = vadd.f32 %v308, %v427
    %v429 = vpop.f32.mrb[0].mxu0
    %v430 = vadd.f32 %v312, %v429
    %431 = vmatprep.mubr.f32.mxu0 0.0
    %432 = vmatmul.mubr.f32.gmra.mrb[0].mxu0 %v214
    %v433 = vpop.f32.mrb[0].mxu0
    %v434 = vadd.f32 %v308, %v433
    %v435 = vpop.f32.mrb[0].mxu0
    %v436 = vadd.f32 %v312, %v435
    %437 = vmatprep.mubr.f32.mxu0 0.0
    %438 = vmatmul.mubr.f32.gmra.mrb[0].mxu0 %v215
    %v439 = vpop.f32.mrb[0].mxu0
    %v440 = vadd.f32 %v308, %v439
    %v441 = vpop.f32.mrb[0].mxu0
    %v442 = vadd.f32 %v312, %v441
    %443 = vmatprep.mubr.f32.mxu0 0.0
    %444 = vmatmul.mubr.f32.gmra.mrb[0].mxu0 %v216
    %v445 = vpop.f32.mrb[0].mxu0
    %v446 = vadd.f32 %v308, %v445
    %v447 = vpop.f32.mrb[0].mxu0
    %v448 = vadd.f32 %v312, %v447
    %449 = vmatprep.mubr.f32.mxu0 0.0
    %450 = vmatmul.mubr.f32.gmra.mrb[0].mxu0 %v217
    %v451 = vpop.f32.mrb[0].mxu0
    %v452 = vadd.f32 %v308, %v451
    %v453 = vpop.f32.mrb[0].mxu0
    %v454 = vadd.f32 %v312, %v453
    %455 = vmatprep.mubr.f32.mxu0 0.0
    %456 = vmatmul.mubr.f32.gmra.mrb[0].mxu0 %v218
    %v457 = vpop.f32.mrb[0].mxu0
    %v458 = vadd.f32 %v308, %v457
    %v459 = vpop.f32.mrb[0].mxu0
    %v460 = vadd.f32 %v312, %v459
    %461 = vmatprep.mubr.f32.mxu0 0.0
    %462 = vmatmul.mubr.f32.gmra.mrb[0].mxu0 %v219
    %v463 = vpop.f32.mrb[0].mxu0
    %v464 = vadd.f32 %v308, %v463
    %v465 = vpop.f32.mrb[0].mxu0
    %v466 = vadd.f32 %v312, %v465
    %467 = vmatprep.mubr.f32.mxu0 0.0
    %468 = vmatmul.mubr.f32.gmra.mrb[0].mxu0 %v220
    %v469 = vpop.f32.mrb[0].mxu0
    %v470 = vadd.f32 %v308, %v469
    %v471 = vpop.f32.mrb[0].mxu0
    %v472 = vadd.f32 %v312, %v471
    %473 = vmatprep.mubr.f32.mxu0 0.0
    %474 = vmatmul.mubr.f32.gmra.mrb[0].mxu0 %v221
    %v475 = vpop.f32.mrb[0].mxu0
    %v476 = vadd.f32 %v308, %v475
    %v477 = vpop.f32.mrb[0].mxu0
    %v478 = vadd.f32 %v312, %v477
    %479 = vmatprep.mubr.f32.mxu0 0.0
    %480 = vmatmul.mubr.f32.gmra.mrb[0].mxu0 %v222
    %v481 = vpop.f32.mrb[0].mxu0
    %v482 = vadd.f32 %v308, %v481
    %v483 = vpop.f32.mrb[0].mxu0
    %v484 = vadd.f32 %v312, %v483
    %485 = vmatprep.mubr.f32.mxu0 0.0
    %486 = vmatmul.mubr.f32.gmra.mrb[0].mxu0 %v223
    %v487 = vpop.f32.mrb[0].mxu0
    %v488 = vadd.f32 %v308, %v487
    %v489 = vpop.f32.mrb[0].mxu0
    %v490 = vadd.f32 %v312, %v489
    %491 = vmatprep.mubr.f32.mxu0 0.0
    %492 = vmatmul.mubr.f32.gmra.mrb[0].mxu0 %v224
    %v493 = vpop.f32.mrb[0].mxu0
    %v494 = vadd.f32 %v308, %v493
    %v495 = vpop.f32.mrb[0].mxu0
    %v496 = vadd.f32 %v312, %v495
    %497 = vmatprep.mubr.f32.mxu0 0.0
    %498 = vmatmul.mubr.f32.gmra.mrb[0].mxu0 %v225
    %v499 = vpop.f32.mrb[0].mxu0
    %v500 = vadd.f32 %v308, %v499
    %v501 = vpop.f32.mrb[0].mxu0
    %v502 = vadd.f32 %v312, %v501
    %503 = vmatprep.mubr.f32.mxu0 0.0
    %504 = vmatmul.mubr.f32.gmra.mrb[0].mxu0 %v226
    %v505 = vpop.f32.mrb[0].mxu0
    %v506 = vadd.f32 %v308, %v505
    %v507 = vpop.f32.mrb[0].mxu0
    %v508 = vadd.f32 %v312, %v507
    %509 = vmatprep.mubr.f32.mxu0 0.0
    %510 = vmatmul.mubr.f32.gmra.mrb[0].mxu0 %v227
    %v511 = vpop.f32.mrb[0].mxu0
    %v512 = vadd.f32 %v308, %v511
    %v513 = vpop.f32.mrb[0].mxu0
    %v514 = vadd.f32 %v312, %v513
    %515 = vmatprep.mubr.f32.mxu0 0.0
    %516 = vmatmul.mubr.f32.gmra.mrb[0].mxu0 %v228
    %v517 = vpop.f32.mrb[0].mxu0
    %v518 = vadd.f32 %v308, %v517
    %v519 = vpop.f32.mrb[0].mxu0
    %v520 = vadd.f32 %v312, %v519
    %521 = vmatprep.mubr.f32.mxu0 0.0
    %522 = vmatmul.mubr.f32.gmra.mrb[0].mxu0 %v229
    %v523 = vpop.f32.mrb[0].mxu0
    %v524 = vadd.f32 %v308, %v523
    %v525 = vpop.f32.mrb[0].mxu0
    %v526 = vadd.f32 %v312, %v525
    %527 = vmatprep.mubr.f32.mxu0 0.0
    %528 = vmatmul.mubr.f32.gmra.mrb[0].mxu0 %v230
    %v529 = vpop.f32.mrb[0].mxu0
    %v530 = vadd.f32 %v308, %v529
    %v531 = vpop.f32.mrb[0].mxu0
    %v532 = vadd.f32 %v312, %v531
    %533 = vmatprep.mubr.f32.mxu0 0.0
    %534 = vmatmul.mubr.f32.gmra.mrb[0].mxu0 %v231
    %v535 = vpop.f32.mrb[0].mxu0
    %v536 = vadd.f32 %v308, %v535
    %v537 = vpop.f32.mrb[0].mxu0
    %v538 = vadd.f32 %v312, %v537
    %539 = vmatprep.mubr.f32.mxu0 0.0
    %540 = vmatmul.mubr.f32.gmra.mrb[0].mxu0 %v232
    %v541 = vpop.f32.mrb[0].mxu0
    %v542 = vadd.f32 %v308, %v541
    %v543 = vpop.f32.mrb[0].mxu0
    %v544 = vadd.f32 %v312, %v543
    %545 = vmatprep.mubr.f32.mxu0 0.0
    %546 = vmatmul.mubr.f32.gmra.mrb[0].mxu0 %v233
    %v547 = vpop.f32.mrb[0].mxu0
    %v548 = vadd.f32 %v308, %v547
    %v549 = vpop.f32.mrb[0].mxu0
    %v550 = vadd.f32 %v312, %v549
    %551 = vmatprep.mubr.f32.mxu0 0.0
    %552 = vmatmul.mubr.f32.gmra.mrb[0].mxu0 %v234
    %v553 = vpop.f32.mrb[0].mxu0
    %v554 = vadd.f32 %v308, %v553
    %v555 = vpop.f32.mrb[0].mxu0
    %v556 = vadd.f32 %v312, %v555
    %557 = vmatprep.mubr.f32.mxu0 0.0
    %558 = vmatmul.mubr.f32.gmra.mrb[0].mxu0 %v235
    %v559 = vpop.f32.mrb[0].mxu0
    %v560 = vadd.f32 %v308, %v559
    %v561 = vpop.f32.mrb[0].mxu0
    %v562 = vadd.f32 %v312, %v561
    %563 = vmatprep.mubr.f32.mxu0 0.0
    %564 = vmatmul.mubr.f32.gmra.mrb[0].mxu0 %v236
    %v565 = vpop.f32.mrb[0].mxu0
    %v566 = vadd.f32 %v308, %v565
    %v567 = vpop.f32.mrb[0].mxu0
    %v568 = vadd.f32 %v312, %v567
    %569 = vmatprep.mubr.f32.mxu0 0.0
    %570 = vmatmul.mubr.f32.gmra.mrb[0].mxu0 %v237
    %v571 = vpop.f32.mrb[0].mxu0
    %v572 = vadd.f32 %v308, %v571
    %v573 = vpop.f32.mrb[0].mxu0
    %v574 = vadd.f32 %v312, %v573
    %575 = vmatprep.mubr.f32.mxu0 0.0
    %576 = vmatmul.mubr.f32.gmra.mrb[0].mxu0 %v238
    %v577 = vpop.f32.mrb[0].mxu0
    %v578 = vadd.f32 %v308, %v577
    %v579 = vpop.f32.mrb[0].mxu0
    %v580 = vadd.f32 %v312, %v579
    %581 = vdwg.mxu0
    %582 = vmatprep.subr.mxu0 %v242
    %583 = vmatpush1.msra.mxu0 %v241
    %584 = vmatprep.subr.mxu0 %v246
    %585 = vmatpush1.msra.mxu0 %v245
    %586 = vmatprep.subr.mxu0 %v250
    %587 = vmatpush1.msra.mxu0 %v249
    %588 = vmatprep.subr.mxu0 %v254
    %589 = vmatpush1.msra.mxu0 %v253
    %590 = vmatprep.subr.mxu0 %v258
    %591 = vmatpush1.msra.mxu0 %v257
    %592 = vmatprep.subr.mxu0 %v262
    %593 = vmatpush1.msra.mxu0 %v261
    %594 = vmatprep.subr.mxu0 %v266
    %595 = vmatpush1.msra.mxu0 %v265
    %596 = vmatprep.subr.mxu0 %v270
    %597 = vmatpush1.msra.mxu0 %v269
    %598 = vmatprep.subr.mxu0 %v274
    %599 = vmatpush1.msra.mxu0 %v273
    %600 = vmatprep.subr.mxu0 %v278
    %601 = vmatpush1.msra.mxu0 %v277
    %602 = vmatprep.subr.mxu0 %v282
    %603 = vmatpush1.msra.mxu0 %v281
    %604 = vmatprep.subr.mxu0 %v286
    %605 = vmatpush1.msra.mxu0 %v285
    %606 = vmatprep.subr.mxu0 %v290
    %607 = vmatpush1.msra.mxu0 %v289
    %608 = vmatprep.subr.mxu0 %v294
    %609 = vmatpush1.msra.mxu0 %v293
    %610 = vmatprep.subr.mxu0 %v298
    %611 = vmatpush1.msra.mxu0 %v297
    %612 = vmatprep.subr.mxu0 %v302
    %613 = vmatpush1.msra.mxu0 %v301
    %614 = vmatprep.subr.mxu0 0.0
    %615 = vmatpush1.msra.mxu0 0.0
    %616 = vmatprep.subr.mxu0 0.0
    %617 = vmatpush1.msra.mxu0 0.0
    %618 = vmatprep.subr.mxu0 0.0
    %619 = vmatpush1.msra.mxu0 0.0
    %620 = vmatprep.subr.mxu0 0.0
    %621 = vmatpush1.msra.mxu0 0.0
    %622 = vmatprep.subr.mxu0 0.0
    %623 = vmatpush1.msra.mxu0 0.0
    %624 = vmatprep.subr.mxu0 0.0
    %625 = vmatpush1.msra.mxu0 0.0
    %626 = vmatprep.subr.mxu0 0.0
    %627 = vmatpush1.msra.mxu0 0.0
    %628 = vmatprep.subr.mxu0 0.0
    %629 = vmatpush1.msra.mxu0 0.0
    %630 = vmatprep.subr.mxu0 0.0
    %631 = vmatpush1.msra.mxu0 0.0
    %632 = vmatprep.subr.mxu0 0.0
    %633 = vmatpush1.msra.mxu0 0.0
    %634 = vmatprep.subr.mxu0 0.0
    %635 = vmatpush1.msra.mxu0 0.0
    %636 = vmatprep.subr.mxu0 0.0
    %637 = vmatpush1.msra.mxu0 0.0
    %638 = vmatprep.subr.mxu0 0.0
    %639 = vmatpush1.msra.mxu0 0.0
    %640 = vmatprep.subr.mxu0 0.0
    %641 = vmatpush1.msra.mxu0 0.0
    %642 = vmatprep.subr.mxu0 0.0
    %643 = vmatpush1.msra.mxu0 0.0
    %644 = vmatprep.subr.mxu0 0.0
    %645 = vmatpush1.msra.mxu0 0.0
    %646 = vmatprep.mubr.f32.mxu0 0.0
    %647 = vmatmul.mubr.f32.gmra.mrb[0].mxu0 %v207
    %v648 = vpop.f32.mrb[0].mxu0
    %v649 = vadd.f32 %v316, %v648
    %v650 = vpop.f32.mrb[0].mxu0
    %v651 = vadd.f32 %v320, %v650
    %652 = vmatprep.mubr.f32.mxu0 0.0
    %653 = vmatmul.mubr.f32.gmra.mrb[0].mxu0 %v208
    %v654 = vpop.f32.mrb[0].mxu0
    %v655 = vadd.f32 %v316, %v654
    %v656 = vpop.f32.mrb[0].mxu0
    %v657 = vadd.f32 %v320, %v656
    %658 = vmatprep.mubr.f32.mxu0 0.0
    %659 = vmatmul.mubr.f32.gmra.mrb[0].mxu0 %v209
    %v660 = vpop.f32.mrb[0].mxu0
    %v661 = vadd.f32 %v316, %v660
    %v662 = vpop.f32.mrb[0].mxu0
    %v663 = vadd.f32 %v320, %v662
    %664 = vmatprep.mubr.f32.mxu0 0.0
    %665 = vmatmul.mubr.f32.gmra.mrb[0].mxu0 %v210
    %v666 = vpop.f32.mrb[0].mxu0
    %v667 = vadd.f32 %v316, %v666
    %v668 = vpop.f32.mrb[0].mxu0
    %v669 = vadd.f32 %v320, %v668
    %670 = vmatprep.mubr.f32.mxu0 0.0
    %671 = vmatmul.mubr.f32.gmra.mrb[0].mxu0 %v211
    %v672 = vpop.f32.mrb[0].mxu0
    %v673 = vadd.f32 %v316, %v672
    %v674 = vpop.f32.mrb[0].mxu0
    %v675 = vadd.f32 %v320, %v674
    %676 = vmatprep.mubr.f32.mxu0 0.0
    %677 = vmatmul.mubr.f32.gmra.mrb[0].mxu0 %v212
    %v678 = vpop.f32.mrb[0].mxu0
    %v679 = vadd.f32 %v316, %v678
    %v680 = vpop.f32.mrb[0].mxu0
    %v681 = vadd.f32 %v320, %v680
    %682 = vmatprep.mubr.f32.mxu0 0.0
    %683 = vmatmul.mubr.f32.gmra.mrb[0].mxu0 %v213
    %v684 = vpop.f32.mrb[0].mxu0
    %v685 = vadd.f32 %v316, %v684
    %v686 = vpop.f32.mrb[0].mxu0
    %v687 = vadd.f32 %v320, %v686
    %688 = vmatprep.mubr.f32.mxu0 0.0
    %689 = vmatmul.mubr.f32.gmra.mrb[0].mxu0 %v214
    %v690 = vpop.f32.mrb[0].mxu0
    %v691 = vadd.f32 %v316, %v690
    %v692 = vpop.f32.mrb[0].mxu0
    %v693 = vadd.f32 %v320, %v692
    %694 = vmatprep.mubr.f32.mxu0 0.0
    %695 = vmatmul.mubr.f32.gmra.mrb[0].mxu0 %v215
    %v696 = vpop.f32.mrb[0].mxu0
    %v697 = vadd.f32 %v316, %v696
    %v698 = vpop.f32.mrb[0].mxu0
    %v699 = vadd.f32 %v320, %v698
    %700 = vmatprep.mubr.f32.mxu0 0.0
    %701 = vmatmul.mubr.f32.gmra.mrb[0].mxu0 %v216
    %v702 = vpop.f32.mrb[0].mxu0
    %v703 = vadd.f32 %v316, %v702
    %v704 = vpop.f32.mrb[0].mxu0
    %v705 = vadd.f32 %v320, %v704
    %706 = vmatprep.mubr.f32.mxu0 0.0
    %707 = vmatmul.mubr.f32.gmra.mrb[0].mxu0 %v217
    %v708 = vpop.f32.mrb[0].mxu0
    %v709 = vadd.f32 %v316, %v708
    %v710 = vpop.f32.mrb[0].mxu0
    %v711 = vadd.f32 %v320, %v710
    %712 = vmatprep.mubr.f32.mxu0 0.0
    %713 = vmatmul.mubr.f32.gmra.mrb[0].mxu0 %v218
    %v714 = vpop.f32.mrb[0].mxu0
    %v715 = vadd.f32 %v316, %v714
    %v716 = vpop.f32.mrb[0].mxu0
    %v717 = vadd.f32 %v320, %v716
    %718 = vmatprep.mubr.f32.mxu0 0.0
    %719 = vmatmul.mubr.f32.gmra.mrb[0].mxu0 %v219
    %v720 = vpop.f32.mrb[0].mxu0
    %v721 = vadd.f32 %v316, %v720
    %v722 = vpop.f32.mrb[0].mxu0
    %v723 = vadd.f32 %v320, %v722
    %724 = vmatprep.mubr.f32.mxu0 0.0
    %725 = vmatmul.mubr.f32.gmra.mrb[0].mxu0 %v220
    %v726 = vpop.f32.mrb[0].mxu0
    %v727 = vadd.f32 %v316, %v726
    %v728 = vpop.f32.mrb[0].mxu0
    %v729 = vadd.f32 %v320, %v728
    %730 = vmatprep.mubr.f32.mxu0 0.0
    %731 = vmatmul.mubr.f32.gmra.mrb[0].mxu0 %v221
    %v732 = vpop.f32.mrb[0].mxu0
    %v733 = vadd.f32 %v316, %v732
    %v734 = vpop.f32.mrb[0].mxu0
    %v735 = vadd.f32 %v320, %v734
    %736 = vmatprep.mubr.f32.mxu0 0.0
    %737 = vmatmul.mubr.f32.gmra.mrb[0].mxu0 %v222
    %v738 = vpop.f32.mrb[0].mxu0
    %v739 = vadd.f32 %v316, %v738
    %v740 = vpop.f32.mrb[0].mxu0
    %v741 = vadd.f32 %v320, %v740
    %742 = vmatprep.mubr.f32.mxu0 0.0
    %743 = vmatmul.mubr.f32.gmra.mrb[0].mxu0 %v223
    %v744 = vpop.f32.mrb[0].mxu0
    %v745 = vadd.f32 %v316, %v744
    %v746 = vpop.f32.mrb[0].mxu0
    %v747 = vadd.f32 %v320, %v746
    %748 = vmatprep.mubr.f32.mxu0 0.0
    %749 = vmatmul.mubr.f32.gmra.mrb[0].mxu0 %v224
    %v750 = vpop.f32.mrb[0].mxu0
    %v751 = vadd.f32 %v316, %v750
    %v752 = vpop.f32.mrb[0].mxu0
    %v753 = vadd.f32 %v320, %v752
    %754 = vmatprep.mubr.f32.mxu0 0.0
    %755 = vmatmul.mubr.f32.gmra.mrb[0].mxu0 %v225
    %v756 = vpop.f32.mrb[0].mxu0
    %v757 = vadd.f32 %v316, %v756
    %v758 = vpop.f32.mrb[0].mxu0
    %v759 = vadd.f32 %v320, %v758
    %760 = vmatprep.mubr.f32.mxu0 0.0
    %761 = vmatmul.mubr.f32.gmra.mrb[0].mxu0 %v226
    %v762 = vpop.f32.mrb[0].mxu0
    %v763 = vadd.f32 %v316, %v762
    %v764 = vpop.f32.mrb[0].mxu0
    %v765 = vadd.f32 %v320, %v764
    %766 = vmatprep.mubr.f32.mxu0 0.0
    %767 = vmatmul.mubr.f32.gmra.mrb[0].mxu0 %v227
    %v768 = vpop.f32.mrb[0].mxu0
    %v769 = vadd.f32 %v316, %v768
    %v770 = vpop.f32.mrb[0].mxu0
    %v771 = vadd.f32 %v320, %v770
    %772 = vmatprep.mubr.f32.mxu0 0.0
    %773 = vmatmul.mubr.f32.gmra.mrb[0].mxu0 %v228
    %v774 = vpop.f32.mrb[0].mxu0
    %v775 = vadd.f32 %v316, %v774
    %v776 = vpop.f32.mrb[0].mxu0
    %v777 = vadd.f32 %v320, %v776
    %778 = vmatprep.mubr.f32.mxu0 0.0
    %779 = vmatmul.mubr.f32.gmra.mrb[0].mxu0 %v229
    %v780 = vpop.f32.mrb[0].mxu0
    %v781 = vadd.f32 %v316, %v780
    %v782 = vpop.f32.mrb[0].mxu0
    %v783 = vadd.f32 %v320, %v782
    %784 = vmatprep.mubr.f32.mxu0 0.0
    %785 = vmatmul.mubr.f32.gmra.mrb[0].mxu0 %v230
    %v786 = vpop.f32.mrb[0].mxu0
    %v787 = vadd.f32 %v316, %v786
    %v788 = vpop.f32.mrb[0].mxu0
    %v789 = vadd.f32 %v320, %v788
    %790 = vmatprep.mubr.f32.mxu0 0.0
    %791 = vmatmul.mubr.f32.gmra.mrb[0].mxu0 %v231
    %v792 = vpop.f32.mrb[0].mxu0
    %v793 = vadd.f32 %v316, %v792
    %v794 = vpop.f32.mrb[0].mxu0
    %v795 = vadd.f32 %v320, %v794
    %796 = vmatprep.mubr.f32.mxu0 0.0
    %797 = vmatmul.mubr.f32.gmra.mrb[0].mxu0 %v232
    %v798 = vpop.f32.mrb[0].mxu0
    %v799 = vadd.f32 %v316, %v798
    %v800 = vpop.f32.mrb[0].mxu0
    %v801 = vadd.f32 %v320, %v800
    %802 = vmatprep.mubr.f32.mxu0 0.0
    %803 = vmatmul.mubr.f32.gmra.mrb[0].mxu0 %v233
    %v804 = vpop.f32.mrb[0].mxu0
    %v805 = vadd.f32 %v316, %v804
    %v806 = vpop.f32.mrb[0].mxu0
    %v807 = vadd.f32 %v320, %v806
    %808 = vmatprep.mubr.f32.mxu0 0.0
    %809 = vmatmul.mubr.f32.gmra.mrb[0].mxu0 %v234
    %v810 = vpop.f32.mrb[0].mxu0
    %v811 = vadd.f32 %v316, %v810
    %v812 = vpop.f32.mrb[0].mxu0
    %v813 = vadd.f32 %v320, %v812
    %814 = vmatprep.mubr.f32.mxu0 0.0
    %815 = vmatmul.mubr.f32.gmra.mrb[0].mxu0 %v235
    %v816 = vpop.f32.mrb[0].mxu0
    %v817 = vadd.f32 %v316, %v816
    %v818 = vpop.f32.mrb[0].mxu0
    %v819 = vadd.f32 %v320, %v818
    %820 = vmatprep.mubr.f32.mxu0 0.0
    %821 = vmatmul.mubr.f32.gmra.mrb[0].mxu0 %v236
    %v822 = vpop.f32.mrb[0].mxu0
    %v823 = vadd.f32 %v316, %v822
    %v824 = vpop.f32.mrb[0].mxu0
    %v825 = vadd.f32 %v320, %v824
    %826 = vmatprep.mubr.f32.mxu0 0.0
    %827 = vmatmul.mubr.f32.gmra.mrb[0].mxu0 %v237
    %v828 = vpop.f32.mrb[0].mxu0
    %v829 = vadd.f32 %v316, %v828
    %v830 = vpop.f32.mrb[0].mxu0
    %v831 = vadd.f32 %v320, %v830
    %832 = vmatprep.mubr.f32.mxu0 0.0
    %833 = vmatmul.mubr.f32.gmra.mrb[0].mxu0 %v238
    %v834 = vpop.f32.mrb[0].mxu0
    %v835 = vadd.f32 %v316, %v834
    %v836 = vpop.f32.mrb[0].mxu0
    %v837 = vadd.f32 %v320, %v836
    %838 = vdwg.mxu0
    %v839 = vmax.f32 %v392, 0.0
    %v840 = vmax.f32 %v394, 0.0
    %v841 = vmax.f32 %v649, 0.0
    %v842 = vmax.f32 %v651, 0.0
    %v843 = vmax.f32 %v398, 0.0
    %v844 = vmax.f32 %v400, 0.0
    %v845 = vmax.f32 %v655, 0.0
    %v846 = vmax.f32 %v657, 0.0
    %v847 = vmax.f32 %v404, 0.0
    %v848 = vmax.f32 %v406, 0.0
    %v849 = vmax.f32 %v661, 0.0
    %v850 = vmax.f32 %v663, 0.0
    %v851 = vmax.f32 %v410, 0.0
    %v852 = vmax.f32 %v412, 0.0
    %v853 = vmax.f32 %v667, 0.0
    %v854 = vmax.f32 %v669, 0.0
    %v855 = vmax.f32 %v416, 0.0
    %v856 = vmax.f32 %v418, 0.0
    %v857 = vmax.f32 %v673, 0.0
    %v858 = vmax.f32 %v675, 0.0
    %v859 = vmax.f32 %v422, 0.0
    %v860 = vmax.f32 %v424, 0.0
    %v861 = vmax.f32 %v679, 0.0
    %v862 = vmax.f32 %v681, 0.0
    %v863 = vmax.f32 %v428, 0.0
    %v864 = vmax.f32 %v430, 0.0
    %v865 = vmax.f32 %v685, 0.0
    %v866 = vmax.f32 %v687, 0.0
    %v867 = vmax.f32 %v434, 0.0
    %v868 = vmax.f32 %v436, 0.0
    %v869 = vmax.f32 %v691, 0.0
    %v870 = vmax.f32 %v693, 0.0
    %v871 = vmax.f32 %v440, 0.0
    %v872 = vmax.f32 %v442, 0.0
    %v873 = vmax.f32 %v697, 0.0
    %v874 = vmax.f32 %v699, 0.0
    %v875 = vmax.f32 %v446, 0.0
    %v876 = vmax.f32 %v448, 0.0
    %v877 = vmax.f32 %v703, 0.0
    %v878 = vmax.f32 %v705, 0.0
    %v879 = vmax.f32 %v452, 0.0
    %v880 = vmax.f32 %v454, 0.0
    %v881 = vmax.f32 %v709, 0.0
    %v882 = vmax.f32 %v711, 0.0
    %v883 = vmax.f32 %v458, 0.0
    %v884 = vmax.f32 %v460, 0.0
    %v885 = vmax.f32 %v715, 0.0
    %v886 = vmax.f32 %v717, 0.0
    %v887 = vmax.f32 %v464, 0.0
    %v888 = vmax.f32 %v466, 0.0
    %v889 = vmax.f32 %v721, 0.0
    %v890 = vmax.f32 %v723, 0.0
    %v891 = vmax.f32 %v470, 0.0
    %v892 = vmax.f32 %v472, 0.0
    %v893 = vmax.f32 %v727, 0.0
    %v894 = vmax.f32 %v729, 0.0
    %v895 = vmax.f32 %v476, 0.0
    %v896 = vmax.f32 %v478, 0.0
    %v897 = vmax.f32 %v733, 0.0
    %v898 = vmax.f32 %v735, 0.0
    %v899 = vmax.f32 %v482, 0.0
    %v900 = vmax.f32 %v484, 0.0
    %v901 = vmax.f32 %v739, 0.0
    %v902 = vmax.f32 %v741, 0.0
    %v903 = vmax.f32 %v488, 0.0
    %v904 = vmax.f32 %v490, 0.0
    %v905 = vmax.f32 %v745, 0.0
    %v906 = vmax.f32 %v747, 0.0
    %v907 = vmax.f32 %v494, 0.0
    %v908 = vmax.f32 %v496, 0.0
    %v909 = vmax.f32 %v751, 0.0
    %v910 = vmax.f32 %v753, 0.0
    %v911 = vmax.f32 %v500, 0.0
    %v912 = vmax.f32 %v502, 0.0
    %v913 = vmax.f32 %v757, 0.0
    %v914 = vmax.f32 %v759, 0.0
    %v915 = vmax.f32 %v506, 0.0
    %v916 = vmax.f32 %v508, 0.0
    %v917 = vmax.f32 %v763, 0.0
    %v918 = vmax.f32 %v765, 0.0
    %v919 = vmax.f32 %v512, 0.0
    %v920 = vmax.f32 %v514, 0.0
    %v921 = vmax.f32 %v769, 0.0
    %v922 = vmax.f32 %v771, 0.0
    %v923 = vmax.f32 %v518, 0.0
    %v924 = vmax.f32 %v520, 0.0
    %v925 = vmax.f32 %v775, 0.0
    %v926 = vmax.f32 %v777, 0.0
    %v927 = vmax.f32 %v524, 0.0
    %v928 = vmax.f32 %v526, 0.0
    %v929 = vmax.f32 %v781, 0.0
    %v930 = vmax.f32 %v783, 0.0
    %v931 = vmax.f32 %v530, 0.0
    %v932 = vmax.f32 %v532, 0.0
    %v933 = vmax.f32 %v787, 0.0
    %v934 = vmax.f32 %v789, 0.0
    %v935 = vmax.f32 %v536, 0.0
    %v936 = vmax.f32 %v538, 0.0
    %v937 = vmax.f32 %v793, 0.0
    %v938 = vmax.f32 %v795, 0.0
    %v939 = vmax.f32 %v542, 0.0
    %v940 = vmax.f32 %v544, 0.0
    %v941 = vmax.f32 %v799, 0.0
    %v942 = vmax.f32 %v801, 0.0
    %v943 = vmax.f32 %v548, 0.0
    %v944 = vmax.f32 %v550, 0.0
    %v945 = vmax.f32 %v805, 0.0
    %v946 = vmax.f32 %v807, 0.0
    %v947 = vmax.f32 %v554, 0.0
    %v948 = vmax.f32 %v556, 0.0
    %v949 = vmax.f32 %v811, 0.0
    %v950 = vmax.f32 %v813, 0.0
    %v951 = vmax.f32 %v560, 0.0
    %v952 = vmax.f32 %v562, 0.0
    %v953 = vmax.f32 %v817, 0.0
    %v954 = vmax.f32 %v819, 0.0
    %v955 = vmax.f32 %v566, 0.0
    %v956 = vmax.f32 %v568, 0.0
    %v957 = vmax.f32 %v823, 0.0
    %v958 = vmax.f32 %v825, 0.0
    %v959 = vmax.f32 %v572, 0.0
    %v960 = vmax.f32 %v574, 0.0
    %v961 = vmax.f32 %v829, 0.0
    %v962 = vmax.f32 %v831, 0.0
    %v963 = vmax.f32 %v578, 0.0
    %v964 = vmax.f32 %v580, 0.0
    %v965 = vmax.f32 %v835, 0.0
    %v966 = vmax.f32 %v837, 0.0
    %967 = vst [vmem:[#allocation11] sm:$0xff] %v839
    %968 = vst [vmem:[#allocation11 + $0x8] sm:$0xff] %v840
    %969 = vst [vmem:[#allocation11 + $0x10] sm:$0xff] %v841
    %970 = vst [vmem:[#allocation11 + $0x18] sm:$0xff] %v842
    %971 = vst [vmem:[#allocation11 + $0x20] sm:$0xff] %v843
    %972 = vst [vmem:[#allocation11 + $0x28] sm:$0xff] %v844
    %973 = vst [vmem:[#allocation11 + $0x30] sm:$0xff] %v845
    %974 = vst [vmem:[#allocation11 + $0x38] sm:$0xff] %v846
    %975 = vst [vmem:[#allocation11 + $0x40] sm:$0xff] %v847
    %976 = vst [vmem:[#allocation11 + $0x48] sm:$0xff] %v848
    %977 = vst [vmem:[#allocation11 + $0x50] sm:$0xff] %v849
    %978 = vst [vmem:[#allocation11 + $0x58] sm:$0xff] %v850
    %979 = vst [vmem:[#allocation11 + $0x60] sm:$0xff] %v851
    %980 = vst [vmem:[#allocation11 + $0x68] sm:$0xff] %v852
    %981 = vst [vmem:[#allocation11 + $0x70] sm:$0xff] %v853
    %982 = vst [vmem:[#allocation11 + $0x78] sm:$0xff] %v854
    %983 = vst [vmem:[#allocation11 + $0x80] sm:$0xff] %v855
    %984 = vst [vmem:[#allocation11 + $0x88] sm:$0xff] %v856
    %985 = vst [vmem:[#allocation11 + $0x90] sm:$0xff] %v857
    %986 = vst [vmem:[#allocation11 + $0x98] sm:$0xff] %v858
    %987 = vst [vmem:[#allocation11 + $0xa0] sm:$0xff] %v859
    %988 = vst [vmem:[#allocation11 + $0xa8] sm:$0xff] %v860
    %989 = vst [vmem:[#allocation11 + $0xb0] sm:$0xff] %v861
    %990 = vst [vmem:[#allocation11 + $0xb8] sm:$0xff] %v862
    %991 = vst [vmem:[#allocation11 + $0xc0] sm:$0xff] %v863
    %992 = vst [vmem:[#allocation11 + $0xc8] sm:$0xff] %v864
    %993 = vst [vmem:[#allocation11 + $0xd0] sm:$0xff] %v865
    %994 = vst [vmem:[#allocation11 + $0xd8] sm:$0xff] %v866
    %995 = vst [vmem:[#allocation11 + $0xe0] sm:$0xff] %v867
    %996 = vst [vmem:[#allocation11 + $0xe8] sm:$0xff] %v868
    %997 = vst [vmem:[#allocation11 + $0xf0] sm:$0xff] %v869
    %998 = vst [vmem:[#allocation11 + $0xf8] sm:$0xff] %v870
    %999 = vst [vmem:[#allocation11 + $0x100] sm:$0xff] %v871
    %1000 = vst [vmem:[#allocation11 + $0x108] sm:$0xff] %v872
    %1001 = vst [vmem:[#allocation11 + $0x110] sm:$0xff] %v873
    %1002 = vst [vmem:[#allocation11 + $0x118] sm:$0xff] %v874
    %1003 = vst [vmem:[#allocation11 + $0x120] sm:$0xff] %v875
    %1004 = vst [vmem:[#allocation11 + $0x128] sm:$0xff] %v876
    %1005 = vst [vmem:[#allocation11 + $0x130] sm:$0xff] %v877
    %1006 = vst [vmem:[#allocation11 + $0x138] sm:$0xff] %v878
    %1007 = vst [vmem:[#allocation11 + $0x140] sm:$0xff] %v879
    %1008 = vst [vmem:[#allocation11 + $0x148] sm:$0xff] %v880
    %1009 = vst [vmem:[#allocation11 + $0x150] sm:$0xff] %v881
    %1010 = vst [vmem:[#allocation11 + $0x158] sm:$0xff] %v882
    %1011 = vst [vmem:[#allocation11 + $0x160] sm:$0xff] %v883
    %1012 = vst [vmem:[#allocation11 + $0x168] sm:$0xff] %v884
    %1013 = vst [vmem:[#allocation11 + $0x170] sm:$0xff] %v885
    %1014 = vst [vmem:[#allocation11 + $0x178] sm:$0xff] %v886
    %1015 = vst [vmem:[#allocation11 + $0x180] sm:$0xff] %v887
    %1016 = vst [vmem:[#allocation11 + $0x188] sm:$0xff] %v888
    %1017 = vst [vmem:[#allocation11 + $0x190] sm:$0xff] %v889
    %1018 = vst [vmem:[#allocation11 + $0x198] sm:$0xff] %v890
    %1019 = vst [vmem:[#allocation11 + $0x1a0] sm:$0xff] %v891
    %1020 = vst [vmem:[#allocation11 + $0x1a8] sm:$0xff] %v892
    %1021 = vst [vmem:[#allocation11 + $0x1b0] sm:$0xff] %v893
    %1022 = vst [vmem:[#allocation11 + $0x1b8] sm:$0xff] %v894
    %1023 = vst [vmem:[#allocation11 + $0x1c0] sm:$0xff] %v895
    %1024 = vst [vmem:[#allocation11 + $0x1c8] sm:$0xff] %v896
    %1025 = vst [vmem:[#allocation11 + $0x1d0] sm:$0xff] %v897
    %1026 = vst [vmem:[#allocation11 + $0x1d8] sm:$0xff] %v898
    %1027 = vst [vmem:[#allocation11 + $0x1e0] sm:$0xff] %v899
    %1028 = vst [vmem:[#allocation11 + $0x1e8] sm:$0xff] %v900
    %1029 = vst [vmem:[#allocation11 + $0x1f0] sm:$0xff] %v901
    %1030 = vst [vmem:[#allocation11 + $0x1f8] sm:$0xff] %v902
    %1031 = vst [vmem:[#allocation11 + $0x200] sm:$0xff] %v903
    %1032 = vst [vmem:[#allocation11 + $0x208] sm:$0xff] %v904
    %1033 = vst [vmem:[#allocation11 + $0x210] sm:$0xff] %v905
    %1034 = vst [vmem:[#allocation11 + $0x218] sm:$0xff] %v906
    %1035 = vst [vmem:[#allocation11 + $0x220] sm:$0xff] %v907
    %1036 = vst [vmem:[#allocation11 + $0x228] sm:$0xff] %v908
    %1037 = vst [vmem:[#allocation11 + $0x230] sm:$0xff] %v909
    %1038 = vst [vmem:[#allocation11 + $0x238] sm:$0xff] %v910
    %1039 = vst [vmem:[#allocation11 + $0x240] sm:$0xff] %v911
    %1040 = vst [vmem:[#allocation11 + $0x248] sm:$0xff] %v912
    %1041 = vst [vmem:[#allocation11 + $0x250] sm:$0xff] %v913
    %1042 = vst [vmem:[#allocation11 + $0x258] sm:$0xff] %v914
    %1043 = vst [vmem:[#allocation11 + $0x260] sm:$0xff] %v915
    %1044 = vst [vmem:[#allocation11 + $0x268] sm:$0xff] %v916
    %1045 = vst [vmem:[#allocation11 + $0x270] sm:$0xff] %v917
    %1046 = vst [vmem:[#allocation11 + $0x278] sm:$0xff] %v918
    %1047 = vst [vmem:[#allocation11 + $0x280] sm:$0xff] %v919
    %1048 = vst [vmem:[#allocation11 + $0x288] sm:$0xff] %v920
    %1049 = vst [vmem:[#allocation11 + $0x290] sm:$0xff] %v921
    %1050 = vst [vmem:[#allocation11 + $0x298] sm:$0xff] %v922
    %1051 = vst [vmem:[#allocation11 + $0x2a0] sm:$0xff] %v923
    %1052 = vst [vmem:[#allocation11 + $0x2a8] sm:$0xff] %v924
    %1053 = vst [vmem:[#allocation11 + $0x2b0] sm:$0xff] %v925
    %1054 = vst [vmem:[#allocation11 + $0x2b8] sm:$0xff] %v926
    %1055 = vst [vmem:[#allocation11 + $0x2c0] sm:$0xff] %v927
    %1056 = vst [vmem:[#allocation11 + $0x2c8] sm:$0xff] %v928
    %1057 = vst [vmem:[#allocation11 + $0x2d0] sm:$0xff] %v929
    %1058 = vst [vmem:[#allocation11 + $0x2d8] sm:$0xff] %v930
    %1059 = vst [vmem:[#allocation11 + $0x2e0] sm:$0xff] %v931
    %1060 = vst [vmem:[#allocation11 + $0x2e8] sm:$0xff] %v932
    %1061 = vst [vmem:[#allocation11 + $0x2f0] sm:$0xff] %v933
    %1062 = vst [vmem:[#allocation11 + $0x2f8] sm:$0xff] %v934
    %1063 = vst [vmem:[#allocation11 + $0x300] sm:$0xff] %v935
    %1064 = vst [vmem:[#allocation11 + $0x308] sm:$0xff] %v936
    %1065 = vst [vmem:[#allocation11 + $0x310] sm:$0xff] %v937
    %1066 = vst [vmem:[#allocation11 + $0x318] sm:$0xff] %v938
    %1067 = vst [vmem:[#allocation11 + $0x320] sm:$0xff] %v939
    %1068 = vst [vmem:[#allocation11 + $0x328] sm:$0xff] %v940
    %1069 = vst [vmem:[#allocation11 + $0x330] sm:$0xff] %v941
    %1070 = vst [vmem:[#allocation11 + $0x338] sm:$0xff] %v942
    %1071 = vst [vmem:[#allocation11 + $0x340] sm:$0xff] %v943
    %1072 = vst [vmem:[#allocation11 + $0x348] sm:$0xff] %v944
    %1073 = vst [vmem:[#allocation11 + $0x350] sm:$0xff] %v945
    %1074 = vst [vmem:[#allocation11 + $0x358] sm:$0xff] %v946
    %1075 = vst [vmem:[#allocation11 + $0x360] sm:$0xff] %v947
    %1076 = vst [vmem:[#allocation11 + $0x368] sm:$0xff] %v948
    %1077 = vst [vmem:[#allocation11 + $0x370] sm:$0xff] %v949
    %1078 = vst [vmem:[#allocation11 + $0x378] sm:$0xff] %v950
    %1079 = vst [vmem:[#allocation11 + $0x380] sm:$0xff] %v951
    %1080 = vst [vmem:[#allocation11 + $0x388] sm:$0xff] %v952
    %1081 = vst [vmem:[#allocation11 + $0x390] sm:$0xff] %v953
    %1082 = vst [vmem:[#allocation11 + $0x398] sm:$0xff] %v954
    %1083 = vst [vmem:[#allocation11 + $0x3a0] sm:$0xff] %v955
    %1084 = vst [vmem:[#allocation11 + $0x3a8] sm:$0xff] %v956
    %1085 = vst [vmem:[#allocation11 + $0x3b0] sm:$0xff] %v957
    %1086 = vst [vmem:[#allocation11 + $0x3b8] sm:$0xff] %v958
    %1087 = vst [vmem:[#allocation11 + $0x3c0] sm:$0xff] %v959
    %1088 = vst [vmem:[#allocation11 + $0x3c8] sm:$0xff] %v960
    %1089 = vst [vmem:[#allocation11 + $0x3d0] sm:$0xff] %v961
    %1090 = vst [vmem:[#allocation11 + $0x3d8] sm:$0xff] %v962
    %1091 = vst [vmem:[#allocation11 + $0x3e0] sm:$0xff] %v963
    %1092 = vst [vmem:[#allocation11 + $0x3e8] sm:$0xff] %v964
    %1093 = vst [vmem:[#allocation11 + $0x3f0] sm:$0xff] %v965
    %1094 = vst [vmem:[#allocation11 + $0x3f8] sm:$0xff] %v966
    %v1095 = vand.u32 2147483647, %v839
    %v1096 = vand.u32 2147483647, %v840
    %v1097 = vand.u32 2147483647, %v841
    %v1098 = vand.u32 2147483647, %v842
    %v1099 = vand.u32 2147483647, %v843
    %v1100 = vand.u32 2147483647, %v844
    %v1101 = vand.u32 2147483647, %v845
    %v1102 = vand.u32 2147483647, %v846
    %v1103 = vand.u32 2147483647, %v847
    %v1104 = vand.u32 2147483647, %v848
    %v1105 = vand.u32 2147483647, %v849
    %v1106 = vand.u32 2147483647, %v850
    %v1107 = vand.u32 2147483647, %v851
    %v1108 = vand.u32 2147483647, %v852
    %v1109 = vand.u32 2147483647, %v853
    %v1110 = vand.u32 2147483647, %v854
    %v1111 = vand.u32 2147483647, %v855
    %v1112 = vand.u32 2147483647, %v856
    %v1113 = vand.u32 2147483647, %v857
    %v1114 = vand.u32 2147483647, %v858
    %v1115 = vand.u32 2147483647, %v859
    %v1116 = vand.u32 2147483647, %v860
    %v1117 = vand.u32 2147483647, %v861
    %v1118 = vand.u32 2147483647, %v862
    %v1119 = vand.u32 2147483647, %v863
    %v1120 = vand.u32 2147483647, %v864
    %v1121 = vand.u32 2147483647, %v865
    %v1122 = vand.u32 2147483647, %v866
    %v1123 = vand.u32 2147483647, %v867
    %v1124 = vand.u32 2147483647, %v868
    %v1125 = vand.u32 2147483647, %v869
    %v1126 = vand.u32 2147483647, %v870
    %v1127 = vand.u32 2147483647, %v871
    %v1128 = vand.u32 2147483647, %v872
    %v1129 = vand.u32 2147483647, %v873
    %v1130 = vand.u32 2147483647, %v874
    %v1131 = vand.u32 2147483647, %v875
    %v1132 = vand.u32 2147483647, %v876
    %v1133 = vand.u32 2147483647, %v877
    %v1134 = vand.u32 2147483647, %v878
    %v1135 = vand.u32 2147483647, %v879
    %v1136 = vand.u32 2147483647, %v880
    %v1137 = vand.u32 2147483647, %v881
    %v1138 = vand.u32 2147483647, %v882
    %v1139 = vand.u32 2147483647, %v883
    %v1140 = vand.u32 2147483647, %v884
    %v1141 = vand.u32 2147483647, %v885
    %v1142 = vand.u32 2147483647, %v886
    %v1143 = vand.u32 2147483647, %v887
    %v1144 = vand.u32 2147483647, %v888
    %v1145 = vand.u32 2147483647, %v889
    %v1146 = vand.u32 2147483647, %v890
    %v1147 = vand.u32 2147483647, %v891
    %v1148 = vand.u32 2147483647, %v892
    %v1149 = vand.u32 2147483647, %v893
    %v1150 = vand.u32 2147483647, %v894
    %v1151 = vand.u32 2147483647, %v895
    %v1152 = vand.u32 2147483647, %v896
    %v1153 = vand.u32 2147483647, %v897
    %v1154 = vand.u32 2147483647, %v898
    %v1155 = vand.u32 2147483647, %v899
    %v1156 = vand.u32 2147483647, %v900
    %v1157 = vand.u32 2147483647, %v901
    %v1158 = vand.u32 2147483647, %v902
    %v1159 = vand.u32 2147483647, %v903
    %v1160 = vand.u32 2147483647, %v904
    %v1161 = vand.u32 2147483647, %v905
    %v1162 = vand.u32 2147483647, %v906
    %v1163 = vand.u32 2147483647, %v907
    %v1164 = vand.u32 2147483647, %v908
    %v1165 = vand.u32 2147483647, %v909
    %v1166 = vand.u32 2147483647, %v910
    %v1167 = vand.u32 2147483647, %v911
    %v1168 = vand.u32 2147483647, %v912
    %v1169 = vand.u32 2147483647, %v913
    %v1170 = vand.u32 2147483647, %v914
    %v1171 = vand.u32 2147483647, %v915
    %v1172 = vand.u32 2147483647, %v916
    %v1173 = vand.u32 2147483647, %v917
    %v1174 = vand.u32 2147483647, %v918
    %v1175 = vand.u32 2147483647, %v919
    %v1176 = vand.u32 2147483647, %v920
    %v1177 = vand.u32 2147483647, %v921
    %v1178 = vand.u32 2147483647, %v922
    %v1179 = vand.u32 2147483647, %v923
    %v1180 = vand.u32 2147483647, %v924
    %v1181 = vand.u32 2147483647, %v925
    %v1182 = vand.u32 2147483647, %v926
    %v1183 = vand.u32 2147483647, %v927
    %v1184 = vand.u32 2147483647, %v928
    %v1185 = vand.u32 2147483647, %v929
    %v1186 = vand.u32 2147483647, %v930
    %v1187 = vand.u32 2147483647, %v931
    %v1188 = vand.u32 2147483647, %v932
    %v1189 = vand.u32 2147483647, %v933
    %v1190 = vand.u32 2147483647, %v934
    %v1191 = vand.u32 2147483647, %v935
    %v1192 = vand.u32 2147483647, %v936
    %v1193 = vand.u32 2147483647, %v937
    %v1194 = vand.u32 2147483647, %v938
    %v1195 = vand.u32 2147483647, %v939
    %v1196 = vand.u32 2147483647, %v940
    %v1197 = vand.u32 2147483647, %v941
    %v1198 = vand.u32 2147483647, %v942
    %v1199 = vand.u32 2147483647, %v943
    %v1200 = vand.u32 2147483647, %v944
    %v1201 = vand.u32 2147483647, %v945
    %v1202 = vand.u32 2147483647, %v946
    %v1203 = vand.u32 2147483647, %v947
    %v1204 = vand.u32 2147483647, %v948
    %v1205 = vand.u32 2147483647, %v949
    %v1206 = vand.u32 2147483647, %v950
    %v1207 = vand.u32 2147483647, %v951
    %v1208 = vand.u32 2147483647, %v952
    %v1209 = vand.u32 2147483647, %v953
    %v1210 = vand.u32 2147483647, %v954
    %v1211 = vand.u32 2147483647, %v955
    %v1212 = vand.u32 2147483647, %v956
    %v1213 = vand.u32 2147483647, %v957
    %v1214 = vand.u32 2147483647, %v958
    %v1215 = vand.u32 2147483647, %v959
    %v1216 = vand.u32 2147483647, %v960
    %v1217 = vand.u32 2147483647, %v961
    %v1218 = vand.u32 2147483647, %v962
    %v1219 = vand.u32 2147483647, %v963
    %v1220 = vand.u32 2147483647, %v964
    %v1221 = vand.u32 2147483647, %v965
    %v1222 = vand.u32 2147483647, %v966
    %v1223 = vadd.f32 %v1095, %v1099
    %v1224 = vadd.f32 %v1223, %v1103
    %v1225 = vadd.f32 %v1224, %v1107
    %v1226 = vadd.f32 %v1225, %v1111
    %v1227 = vadd.f32 %v1226, %v1115
    %v1228 = vadd.f32 %v1227, %v1119
    %v1229 = vadd.f32 %v1228, %v1123
    %v1230 = vadd.f32 %v1229, %v1127
    %v1231 = vadd.f32 %v1230, %v1131
    %v1232 = vadd.f32 %v1231, %v1135
    %v1233 = vadd.f32 %v1232, %v1139
    %v1234 = vadd.f32 %v1233, %v1143
    %v1235 = vadd.f32 %v1234, %v1147
    %v1236 = vadd.f32 %v1235, %v1151
    %v1237 = vadd.f32 %v1236, %v1155
    %v1238 = vadd.f32 %v1237, %v1159
    %v1239 = vadd.f32 %v1238, %v1163
    %v1240 = vadd.f32 %v1239, %v1167
    %v1241 = vadd.f32 %v1240, %v1171
    %v1242 = vadd.f32 %v1241, %v1175
    %v1243 = vadd.f32 %v1242, %v1179
    %v1244 = vadd.f32 %v1243, %v1183
    %v1245 = vadd.f32 %v1244, %v1187
    %v1246 = vadd.f32 %v1245, %v1191
    %v1247 = vadd.f32 %v1246, %v1195
    %v1248 = vadd.f32 %v1247, %v1199
    %v1249 = vadd.f32 %v1248, %v1203
    %v1250 = vadd.f32 %v1249, %v1207
    %v1251 = vadd.f32 %v1250, %v1211
    %v1252 = vadd.f32 %v1251, %v1215
    %v1253 = vadd.f32 %v1252, %v1219
    %v1254 = vrot.slane %v1253, 4
    %v1255 = vadd.f32 %v1253, %v1254
    %v1256 = vrot.slane %v1255, 2
    %v1257 = vadd.f32 %v1255, %v1256
    %v1258 = vrot.slane %v1257, 1
    %v1259 = vadd.f32 %v1257, %v1258
    %v1260 = vadd.f32 %v1096, %v1100
    %v1261 = vadd.f32 %v1260, %v1104
    %v1262 = vadd.f32 %v1261, %v1108
    %v1263 = vadd.f32 %v1262, %v1112
    %v1264 = vadd.f32 %v1263, %v1116
    %v1265 = vadd.f32 %v1264, %v1120
    %v1266 = vadd.f32 %v1265, %v1124
    %v1267 = vadd.f32 %v1266, %v1128
    %v1268 = vadd.f32 %v1267, %v1132
    %v1269 = vadd.f32 %v1268, %v1136
    %v1270 = vadd.f32 %v1269, %v1140
    %v1271 = vadd.f32 %v1270, %v1144
    %v1272 = vadd.f32 %v1271, %v1148
    %v1273 = vadd.f32 %v1272, %v1152
    %v1274 = vadd.f32 %v1273, %v1156
    %v1275 = vadd.f32 %v1274, %v1160
    %v1276 = vadd.f32 %v1275, %v1164
    %v1277 = vadd.f32 %v1276, %v1168
    %v1278 = vadd.f32 %v1277, %v1172
    %v1279 = vadd.f32 %v1278, %v1176
    %v1280 = vadd.f32 %v1279, %v1180
    %v1281 = vadd.f32 %v1280, %v1184
    %v1282 = vadd.f32 %v1281, %v1188
    %v1283 = vadd.f32 %v1282, %v1192
    %v1284 = vadd.f32 %v1283, %v1196
    %v1285 = vadd.f32 %v1284, %v1200
    %v1286 = vadd.f32 %v1285, %v1204
    %v1287 = vadd.f32 %v1286, %v1208
    %v1288 = vadd.f32 %v1287, %v1212
    %v1289 = vadd.f32 %v1288, %v1216
    %v1290 = vadd.f32 %v1289, %v1220
    %v1291 = vrot.slane %v1290, 4
    %v1292 = vadd.f32 %v1290, %v1291
    %v1293 = vrot.slane %v1292, 2
    %v1294 = vadd.f32 %v1292, %v1293
    %v1295 = vrot.slane %v1294, 1
    %v1296 = vadd.f32 %v1294, %v1295
    %v1297 = vadd.f32 %v1097, %v1101
    %v1298 = vadd.f32 %v1297, %v1105
    %v1299 = vadd.f32 %v1298, %v1109
    %v1300 = vadd.f32 %v1299, %v1113
    %v1301 = vadd.f32 %v1300, %v1117
    %v1302 = vadd.f32 %v1301, %v1121
    %v1303 = vadd.f32 %v1302, %v1125
    %v1304 = vadd.f32 %v1303, %v1129
    %v1305 = vadd.f32 %v1304, %v1133
    %v1306 = vadd.f32 %v1305, %v1137
    %v1307 = vadd.f32 %v1306, %v1141
    %v1308 = vadd.f32 %v1307, %v1145
    %v1309 = vadd.f32 %v1308, %v1149
    %v1310 = vadd.f32 %v1309, %v1153
    %v1311 = vadd.f32 %v1310, %v1157
    %v1312 = vadd.f32 %v1311, %v1161
    %v1313 = vadd.f32 %v1312, %v1165
    %v1314 = vadd.f32 %v1313, %v1169
    %v1315 = vadd.f32 %v1314, %v1173
    %v1316 = vadd.f32 %v1315, %v1177
    %v1317 = vadd.f32 %v1316, %v1181
    %v1318 = vadd.f32 %v1317, %v1185
    %v1319 = vadd.f32 %v1318, %v1189
    %v1320 = vadd.f32 %v1319, %v1193
    %v1321 = vadd.f32 %v1320, %v1197
    %v1322 = vadd.f32 %v1321, %v1201
    %v1323 = vadd.f32 %v1322, %v1205
    %v1324 = vadd.f32 %v1323, %v1209
    %v1325 = vadd.f32 %v1324, %v1213
    %v1326 = vadd.f32 %v1325, %v1217
    %v1327 = vadd.f32 %v1326, %v1221
    %v1328 = vrot.slane %v1327, 4
    %v1329 = vadd.f32 %v1327, %v1328
    %v1330 = vrot.slane %v1329, 2
    %v1331 = vadd.f32 %v1329, %v1330
    %v1332 = vrot.slane %v1331, 1
    %v1333 = vadd.f32 %v1331, %v1332
    %v1334 = vadd.f32 %v1098, %v1102
    %v1335 = vadd.f32 %v1334, %v1106
    %v1336 = vadd.f32 %v1335, %v1110
    %v1337 = vadd.f32 %v1336, %v1114
    %v1338 = vadd.f32 %v1337, %v1118
    %v1339 = vadd.f32 %v1338, %v1122
    %v1340 = vadd.f32 %v1339, %v1126
    %v1341 = vadd.f32 %v1340, %v1130
    %v1342 = vadd.f32 %v1341, %v1134
    %v1343 = vadd.f32 %v1342, %v1138
    %v1344 = vadd.f32 %v1343, %v1142
    %v1345 = vadd.f32 %v1344, %v1146
    %v1346 = vadd.f32 %v1345, %v1150
    %v1347 = vadd.f32 %v1346, %v1154
    %v1348 = vadd.f32 %v1347, %v1158
    %v1349 = vadd.f32 %v1348, %v1162
    %v1350 = vadd.f32 %v1349, %v1166
    %v1351 = vadd.f32 %v1350, %v1170
    %v1352 = vadd.f32 %v1351, %v1174
    %v1353 = vadd.f32 %v1352, %v1178
    %v1354 = vadd.f32 %v1353, %v1182
    %v1355 = vadd.f32 %v1354, %v1186
    %v1356 = vadd.f32 %v1355, %v1190
    %v1357 = vadd.f32 %v1356, %v1194
    %v1358 = vadd.f32 %v1357, %v1198
    %v1359 = vadd.f32 %v1358, %v1202
    %v1360 = vadd.f32 %v1359, %v1206
    %v1361 = vadd.f32 %v1360, %v1210
    %v1362 = vadd.f32 %v1361, %v1214
    %v1363 = vadd.f32 %v1362, %v1218
    %v1364 = vadd.f32 %v1363, %v1222
    %v1365 = vrot.slane %v1364, 4
    %v1366 = vadd.f32 %v1364, %v1365
    %v1367 = vrot.slane %v1366, 2
    %v1368 = vadd.f32 %v1366, %v1367
    %v1369 = vrot.slane %v1368, 1
    %v1370 = vadd.f32 %v1368, %v1369
    %v1375 = vcombine.low %v1259, %v1296
    %v1376 = vcombine.low %v1333, %v1370
    %v1378 = vunpack.c.l.s4 1966171168
    %v1379 = vunpack.c.0.s8 %v1378
    %v1380 = vlaneseq
    %v1381 = vshrl.u32 %v1380, 7
    %v1382 = vsub.s32 %v1379, %v1381
    %v1383 = vrot.slane %v1375, %v1382
    %v1385 = vunpack.c.l.s4 1966171168
    %v1386 = vunpack.c.0.s8 %v1385
    %v1387 = vlaneseq
    %v1388 = vshrl.u32 %v1387, 7
    %v1389 = vsub.s32 %v1386, %v1388
    %v1390 = vrot.slane %v1376, %v1389
    %v1391 = vcombine.low %v1383, %v1390
    %v1393 = vunpack.c.l.s4 1966171168
    %v1394 = vunpack.c.0.s8 %v1393
    %v1395 = vlaneseq
    %v1396 = vshrl.u32 %v1395, 7
    %v1397 = vsub.s32 %v1394, %v1396
    %v1398 = vrot.slane %v1391, %v1397
    %v1400 = vlaneseq
    %vm1401 = vcmp.ge.s32.totalorder %v1400, 0
    %vm1402 = vcmp.lt.s32.totalorder %v1400, 512
    %vm1403 = vmand %vm1401, %vm1402
    %1404 = vst.msk [vmem:[#allocation14] sm:$0xf] %vm1403, %v1398
    %v1405 = vld [vmem:[#allocation3] sm:$0xff]
    %v1406 = vld [vmem:[#allocation3 + $0x8] sm:$0xff]
    %v1407 = vld [vmem:[#allocation3 + $0x10] sm:$0xff]
    %v1408 = vld [vmem:[#allocation3 + $0x18] sm:$0xff]
    %v1409 = vld [vmem:[#allocation3 + $0x20] sm:$0xff]
    %v1410 = vld [vmem:[#allocation3 + $0x28] sm:$0xff]
    %v1411 = vld [vmem:[#allocation3 + $0x30] sm:$0xff]
    %v1412 = vld [vmem:[#allocation3 + $0x38] sm:$0xff]
    %v1413 = vld [vmem:[#allocation3 + $0x40] sm:$0xff]
    %v1414 = vld [vmem:[#allocation3 + $0x48] sm:$0xff]
    %v1415 = vld [vmem:[#allocation3 + $0x50] sm:$0xff]
    %v1416 = vld [vmem:[#allocation3 + $0x58] sm:$0xff]
    %v1417 = vld [vmem:[#allocation3 + $0x60] sm:$0xff]
    %v1418 = vld [vmem:[#allocation3 + $0x68] sm:$0xff]
    %v1419 = vld [vmem:[#allocation3 + $0x70] sm:$0xff]
    %v1420 = vld [vmem:[#allocation3 + $0x78] sm:$0xff]
    %v1421 = vld [vmem:[#allocation3 + $0x80] sm:$0xff]
    %v1422 = vld [vmem:[#allocation3 + $0x88] sm:$0xff]
    %v1423 = vld [vmem:[#allocation3 + $0x90] sm:$0xff]
    %v1424 = vld [vmem:[#allocation3 + $0x98] sm:$0xff]
    %v1425 = vld [vmem:[#allocation3 + $0xa0] sm:$0xff]
    %v1426 = vld [vmem:[#allocation3 + $0xa8] sm:$0xff]
    %v1427 = vld [vmem:[#allocation3 + $0xb0] sm:$0xff]
    %v1428 = vld [vmem:[#allocation3 + $0xb8] sm:$0xff]
    %v1429 = vld [vmem:[#allocation3 + $0xc0] sm:$0xff]
    %v1430 = vld [vmem:[#allocation3 + $0xc8] sm:$0xff]
    %v1431 = vld [vmem:[#allocation3 + $0xd0] sm:$0xff]
    %v1432 = vld [vmem:[#allocation3 + $0xd8] sm:$0xff]
    %v1433 = vld [vmem:[#allocation3 + $0xe0] sm:$0xff]
    %v1434 = vld [vmem:[#allocation3 + $0xe8] sm:$0xff]
    %v1435 = vld [vmem:[#allocation3 + $0xf0] sm:$0xff]
    %v1436 = vld [vmem:[#allocation3 + $0xf8] sm:$0xff]
    %v1437 = vld [vmem:[#allocation9] sm:$0xff]
    %v1438 = vld [vmem:[#allocation9 + $0x8] sm:$0xff]
    %v1439 = vld [vmem:[#allocation9 + $0x10] sm:$0xff]
    %v1440 = vld [vmem:[#allocation9 + $0x18] sm:$0xff]
    %v1441 = vld [vmem:[#allocation9 + $0x20] sm:$0xff]
    %v1442 = vld [vmem:[#allocation9 + $0x28] sm:$0xff]
    %v1443 = vld [vmem:[#allocation9 + $0x30] sm:$0xff]
    %v1444 = vld [vmem:[#allocation9 + $0x38] sm:$0xff]
    %v1445 = vld [vmem:[#allocation9 + $0x40] sm:$0xff]
    %v1446 = vld [vmem:[#allocation9 + $0x48] sm:$0xff]
    %v1447 = vld [vmem:[#allocation9 + $0x50] sm:$0xff]
    %v1448 = vld [vmem:[#allocation9 + $0x58] sm:$0xff]
    %v1449 = vld [vmem:[#allocation9 + $0x60] sm:$0xff]
    %v1450 = vld [vmem:[#allocation9 + $0x68] sm:$0xff]
    %v1451 = vld [vmem:[#allocation9 + $0x70] sm:$0xff]
    %v1452 = vld [vmem:[#allocation9 + $0x78] sm:$0xff]
    %v1453 = vld [vmem:[#allocation9 + $0x80] sm:$0xff]
    %v1454 = vld [vmem:[#allocation9 + $0x88] sm:$0xff]
    %v1455 = vld [vmem:[#allocation9 + $0x90] sm:$0xff]
    %v1456 = vld [vmem:[#allocation9 + $0x98] sm:$0xff]
    %v1457 = vld [vmem:[#allocation9 + $0xa0] sm:$0xff]
    %v1458 = vld [vmem:[#allocation9 + $0xa8] sm:$0xff]
    %v1459 = vld [vmem:[#allocation9 + $0xb0] sm:$0xff]
    %v1460 = vld [vmem:[#allocation9 + $0xb8] sm:$0xff]
    %v1461 = vld [vmem:[#allocation9 + $0xc0] sm:$0xff]
    %v1462 = vld [vmem:[#allocation9 + $0xc8] sm:$0xff]
    %v1463 = vld [vmem:[#allocation9 + $0xd0] sm:$0xff]
    %v1464 = vld [vmem:[#allocation9 + $0xd8] sm:$0xff]
    %v1465 = vld [vmem:[#allocation9 + $0xe0] sm:$0xff]
    %v1466 = vld [vmem:[#allocation9 + $0xe8] sm:$0xff]
    %v1467 = vld [vmem:[#allocation9 + $0xf0] sm:$0xff]
    %v1468 = vld [vmem:[#allocation9 + $0xf8] sm:$0xff]
    %v1469 = vld [vmem:[#allocation9 + $0x100] sm:$0xff]
    %v1470 = vld [vmem:[#allocation9 + $0x108] sm:$0xff]
    %v1471 = vld [vmem:[#allocation9 + $0x110] sm:$0xff]
    %v1472 = vld [vmem:[#allocation9 + $0x118] sm:$0xff]
    %v1473 = vld [vmem:[#allocation9 + $0x120] sm:$0xff]
    %v1474 = vld [vmem:[#allocation9 + $0x128] sm:$0xff]
    %v1475 = vld [vmem:[#allocation9 + $0x130] sm:$0xff]
    %v1476 = vld [vmem:[#allocation9 + $0x138] sm:$0xff]
    %v1477 = vld [vmem:[#allocation9 + $0x140] sm:$0xff]
    %v1478 = vld [vmem:[#allocation9 + $0x148] sm:$0xff]
    %v1479 = vld [vmem:[#allocation9 + $0x150] sm:$0xff]
    %v1480 = vld [vmem:[#allocation9 + $0x158] sm:$0xff]
    %v1481 = vld [vmem:[#allocation9 + $0x160] sm:$0xff]
    %v1482 = vld [vmem:[#allocation9 + $0x168] sm:$0xff]
    %v1483 = vld [vmem:[#allocation9 + $0x170] sm:$0xff]
    %v1484 = vld [vmem:[#allocation9 + $0x178] sm:$0xff]
    %v1485 = vld [vmem:[#allocation9 + $0x180] sm:$0xff]
    %v1486 = vld [vmem:[#allocation9 + $0x188] sm:$0xff]
    %v1487 = vld [vmem:[#allocation9 + $0x190] sm:$0xff]
    %v1488 = vld [vmem:[#allocation9 + $0x198] sm:$0xff]
    %v1489 = vld [vmem:[#allocation9 + $0x1a0] sm:$0xff]
    %v1490 = vld [vmem:[#allocation9 + $0x1a8] sm:$0xff]
    %v1491 = vld [vmem:[#allocation9 + $0x1b0] sm:$0xff]
    %v1492 = vld [vmem:[#allocation9 + $0x1b8] sm:$0xff]
    %v1493 = vld [vmem:[#allocation9 + $0x1c0] sm:$0xff]
    %v1494 = vld [vmem:[#allocation9 + $0x1c8] sm:$0xff]
    %v1495 = vld [vmem:[#allocation9 + $0x1d0] sm:$0xff]
    %v1496 = vld [vmem:[#allocation9 + $0x1d8] sm:$0xff]
    %v1497 = vld [vmem:[#allocation9 + $0x1e0] sm:$0xff]
    %v1498 = vld [vmem:[#allocation9 + $0x1e8] sm:$0xff]
    %v1499 = vld [vmem:[#allocation9 + $0x1f0] sm:$0xff]
    %v1500 = vld [vmem:[#allocation9 + $0x1f8] sm:$0xff]
    %1501 = vmatprep.subr.mxu0 0.0
    %1502 = vmatpush1.msra.mxu0 %v1437
    %1503 = vmatprep.subr.mxu0 0.0
    %1504 = vmatpush1.msra.mxu0 %v1438
    %1505 = vmatprep.subr.mxu0 0.0
    %1506 = vmatpush1.msra.mxu0 %v1439
    %1507 = vmatprep.subr.mxu0 0.0
    %1508 = vmatpush1.msra.mxu0 %v1440
    %1509 = vmatprep.subr.mxu0 0.0
    %1510 = vmatpush1.msra.mxu0 %v1441
    %1511 = vmatprep.subr.mxu0 0.0
    %1512 = vmatpush1.msra.mxu0 %v1442
    %1513 = vmatprep.subr.mxu0 0.0
    %1514 = vmatpush1.msra.mxu0 %v1443
    %1515 = vmatprep.subr.mxu0 0.0
    %1516 = vmatpush1.msra.mxu0 %v1444
    %1517 = vmatprep.subr.mxu0 0.0
    %1518 = vmatpush1.msra.mxu0 %v1445
    %1519 = vmatprep.subr.mxu0 0.0
    %1520 = vmatpush1.msra.mxu0 %v1446
    %1521 = vmatprep.subr.mxu0 0.0
    %1522 = vmatpush1.msra.mxu0 %v1447
    %1523 = vmatprep.subr.mxu0 0.0
    %1524 = vmatpush1.msra.mxu0 %v1448
    %1525 = vmatprep.subr.mxu0 0.0
    %1526 = vmatpush1.msra.mxu0 %v1449
    %1527 = vmatprep.subr.mxu0 0.0
    %1528 = vmatpush1.msra.mxu0 %v1450
    %1529 = vmatprep.subr.mxu0 0.0
    %1530 = vmatpush1.msra.mxu0 %v1451
    %1531 = vmatprep.subr.mxu0 0.0
    %1532 = vmatpush1.msra.mxu0 %v1452
    %1533 = vmatprep.subr.mxu0 0.0
    %1534 = vmatpush1.msra.mxu0 %v1453
    %1535 = vmatprep.subr.mxu0 0.0
    %1536 = vmatpush1.msra.mxu0 %v1454
    %1537 = vmatprep.subr.mxu0 0.0
    %1538 = vmatpush1.msra.mxu0 %v1455
    %1539 = vmatprep.subr.mxu0 0.0
    %1540 = vmatpush1.msra.mxu0 %v1456
    %1541 = vmatprep.subr.mxu0 0.0
    %1542 = vmatpush1.msra.mxu0 %v1457
    %1543 = vmatprep.subr.mxu0 0.0
    %1544 = vmatpush1.msra.mxu0 %v1458
    %1545 = vmatprep.subr.mxu0 0.0
    %1546 = vmatpush1.msra.mxu0 %v1459
    %1547 = vmatprep.subr.mxu0 0.0
    %1548 = vmatpush1.msra.mxu0 %v1460
    %1549 = vmatprep.subr.mxu0 0.0
    %1550 = vmatpush1.msra.mxu0 %v1461
    %1551 = vmatprep.subr.mxu0 0.0
    %1552 = vmatpush1.msra.mxu0 %v1462
    %1553 = vmatprep.subr.mxu0 0.0
    %1554 = vmatpush1.msra.mxu0 %v1463
    %1555 = vmatprep.subr.mxu0 0.0
    %1556 = vmatpush1.msra.mxu0 %v1464
    %1557 = vmatprep.subr.mxu0 0.0
    %1558 = vmatpush1.msra.mxu0 %v1465
    %1559 = vmatprep.subr.mxu0 0.0
    %1560 = vmatpush1.msra.mxu0 %v1466
    %1561 = vmatprep.subr.mxu0 0.0
    %1562 = vmatpush1.msra.mxu0 %v1467
    %1563 = vmatprep.subr.mxu0 0.0
    %1564 = vmatpush1.msra.mxu0 %v1468
    %1565 = vmatprep.mubr.f32.mxu0 %v840
    %1566 = vmatmul.mubr.f32.gmra.mrb[0].mxu0 %v839
    %v1567 = vpop.f32.mrb[0].mxu0
    %v1568 = vadd.f32 0.0, %v1567
    %v1569 = vpop.f32.mrb[0].mxu0
    %1570 = vmatprep.mubr.f32.mxu0 %v844
    %1571 = vmatmul.mubr.f32.gmra.mrb[0].mxu0 %v843
    %v1572 = vpop.f32.mrb[0].mxu0
    %v1573 = vadd.f32 0.0, %v1572
    %v1574 = vpop.f32.mrb[0].mxu0
    %1575 = vmatprep.mubr.f32.mxu0 %v848
    %1576 = vmatmul.mubr.f32.gmra.mrb[0].mxu0 %v847
    %v1577 = vpop.f32.mrb[0].mxu0
    %v1578 = vadd.f32 0.0, %v1577
    %v1579 = vpop.f32.mrb[0].mxu0
    %1580 = vmatprep.mubr.f32.mxu0 %v852
    %1581 = vmatmul.mubr.f32.gmra.mrb[0].mxu0 %v851
    %v1582 = vpop.f32.mrb[0].mxu0
    %v1583 = vadd.f32 0.0, %v1582
    %v1584 = vpop.f32.mrb[0].mxu0
    %1585 = vmatprep.mubr.f32.mxu0 %v856
    %1586 = vmatmul.mubr.f32.gmra.mrb[0].mxu0 %v855
    %v1587 = vpop.f32.mrb[0].mxu0
    %v1588 = vadd.f32 0.0, %v1587
    %v1589 = vpop.f32.mrb[0].mxu0
    %1590 = vmatprep.mubr.f32.mxu0 %v860
    %1591 = vmatmul.mubr.f32.gmra.mrb[0].mxu0 %v859
    %v1592 = vpop.f32.mrb[0].mxu0
    %v1593 = vadd.f32 0.0, %v1592
    %v1594 = vpop.f32.mrb[0].mxu0
    %1595 = vmatprep.mubr.f32.mxu0 %v864
    %1596 = vmatmul.mubr.f32.gmra.mrb[0].mxu0 %v863
    %v1597 = vpop.f32.mrb[0].mxu0
    %v1598 = vadd.f32 0.0, %v1597
    %v1599 = vpop.f32.mrb[0].mxu0
    %1600 = vmatprep.mubr.f32.mxu0 %v868
    %1601 = vmatmul.mubr.f32.gmra.mrb[0].mxu0 %v867
    %v1602 = vpop.f32.mrb[0].mxu0
    %v1603 = vadd.f32 0.0, %v1602
    %v1604 = vpop.f32.mrb[0].mxu0
    %1605 = vmatprep.mubr.f32.mxu0 %v872
    %1606 = vmatmul.mubr.f32.gmra.mrb[0].mxu0 %v871
    %v1607 = vpop.f32.mrb[0].mxu0
    %v1608 = vadd.f32 0.0, %v1607
    %v1609 = vpop.f32.mrb[0].mxu0
    %1610 = vmatprep.mubr.f32.mxu0 %v876
    %1611 = vmatmul.mubr.f32.gmra.mrb[0].mxu0 %v875
    %v1612 = vpop.f32.mrb[0].mxu0
    %v1613 = vadd.f32 0.0, %v1612
    %v1614 = vpop.f32.mrb[0].mxu0
    %1615 = vmatprep.mubr.f32.mxu0 %v880
    %1616 = vmatmul.mubr.f32.gmra.mrb[0].mxu0 %v879
    %v1617 = vpop.f32.mrb[0].mxu0
    %v1618 = vadd.f32 0.0, %v1617
    %v1619 = vpop.f32.mrb[0].mxu0
    %1620 = vmatprep.mubr.f32.mxu0 %v884
    %1621 = vmatmul.mubr.f32.gmra.mrb[0].mxu0 %v883
    %v1622 = vpop.f32.mrb[0].mxu0
    %v1623 = vadd.f32 0.0, %v1622
    %v1624 = vpop.f32.mrb[0].mxu0
    %1625 = vmatprep.mubr.f32.mxu0 %v888
    %1626 = vmatmul.mubr.f32.gmra.mrb[0].mxu0 %v887
    %v1627 = vpop.f32.mrb[0].mxu0
    %v1628 = vadd.f32 0.0, %v1627
    %v1629 = vpop.f32.mrb[0].mxu0
    %1630 = vmatprep.mubr.f32.mxu0 %v892
    %1631 = vmatmul.mubr.f32.gmra.mrb[0].mxu0 %v891
    %v1632 = vpop.f32.mrb[0].mxu0
    %v1633 = vadd.f32 0.0, %v1632
    %v1634 = vpop.f32.mrb[0].mxu0
    %1635 = vmatprep.mubr.f32.mxu0 %v896
    %1636 = vmatmul.mubr.f32.gmra.mrb[0].mxu0 %v895
    %v1637 = vpop.f32.mrb[0].mxu0
    %v1638 = vadd.f32 0.0, %v1637
    %v1639 = vpop.f32.mrb[0].mxu0
    %1640 = vmatprep.mubr.f32.mxu0 %v900
    %1641 = vmatmul.mubr.f32.gmra.mrb[0].mxu0 %v899
    %v1642 = vpop.f32.mrb[0].mxu0
    %v1643 = vadd.f32 0.0, %v1642
    %v1644 = vpop.f32.mrb[0].mxu0
    %1645 = vmatprep.mubr.f32.mxu0 %v904
    %1646 = vmatmul.mubr.f32.gmra.mrb[0].mxu0 %v903
    %v1647 = vpop.f32.mrb[0].mxu0
    %v1648 = vadd.f32 0.0, %v1647
    %v1649 = vpop.f32.mrb[0].mxu0
    %1650 = vmatprep.mubr.f32.mxu0 %v908
    %1651 = vmatmul.mubr.f32.gmra.mrb[0].mxu0 %v907
    %v1652 = vpop.f32.mrb[0].mxu0
    %v1653 = vadd.f32 0.0, %v1652
    %v1654 = vpop.f32.mrb[0].mxu0
    %1655 = vmatprep.mubr.f32.mxu0 %v912
    %1656 = vmatmul.mubr.f32.gmra.mrb[0].mxu0 %v911
    %v1657 = vpop.f32.mrb[0].mxu0
    %v1658 = vadd.f32 0.0, %v1657
    %v1659 = vpop.f32.mrb[0].mxu0
    %1660 = vmatprep.mubr.f32.mxu0 %v916
    %1661 = vmatmul.mubr.f32.gmra.mrb[0].mxu0 %v915
    %v1662 = vpop.f32.mrb[0].mxu0
    %v1663 = vadd.f32 0.0, %v1662
    %v1664 = vpop.f32.mrb[0].mxu0
    %1665 = vmatprep.mubr.f32.mxu0 %v920
    %1666 = vmatmul.mubr.f32.gmra.mrb[0].mxu0 %v919
    %v1667 = vpop.f32.mrb[0].mxu0
    %v1668 = vadd.f32 0.0, %v1667
    %v1669 = vpop.f32.mrb[0].mxu0
    %1670 = vmatprep.mubr.f32.mxu0 %v924
    %1671 = vmatmul.mubr.f32.gmra.mrb[0].mxu0 %v923
    %v1672 = vpop.f32.mrb[0].mxu0
    %v1673 = vadd.f32 0.0, %v1672
    %v1674 = vpop.f32.mrb[0].mxu0
    %1675 = vmatprep.mubr.f32.mxu0 %v928
    %1676 = vmatmul.mubr.f32.gmra.mrb[0].mxu0 %v927
    %v1677 = vpop.f32.mrb[0].mxu0
    %v1678 = vadd.f32 0.0, %v1677
    %v1679 = vpop.f32.mrb[0].mxu0
    %1680 = vmatprep.mubr.f32.mxu0 %v932
    %1681 = vmatmul.mubr.f32.gmra.mrb[0].mxu0 %v931
    %v1682 = vpop.f32.mrb[0].mxu0
    %v1683 = vadd.f32 0.0, %v1682
    %v1684 = vpop.f32.mrb[0].mxu0
    %1685 = vmatprep.mubr.f32.mxu0 %v936
    %1686 = vmatmul.mubr.f32.gmra.mrb[0].mxu0 %v935
    %v1687 = vpop.f32.mrb[0].mxu0
    %v1688 = vadd.f32 0.0, %v1687
    %v1689 = vpop.f32.mrb[0].mxu0
    %1690 = vmatprep.mubr.f32.mxu0 %v940
    %1691 = vmatmul.mubr.f32.gmra.mrb[0].mxu0 %v939
    %v1692 = vpop.f32.mrb[0].mxu0
    %v1693 = vadd.f32 0.0, %v1692
    %v1694 = vpop.f32.mrb[0].mxu0
    %1695 = vmatprep.mubr.f32.mxu0 %v944
    %1696 = vmatmul.mubr.f32.gmra.mrb[0].mxu0 %v943
    %v1697 = vpop.f32.mrb[0].mxu0
    %v1698 = vadd.f32 0.0, %v1697
    %v1699 = vpop.f32.mrb[0].mxu0
    %1700 = vmatprep.mubr.f32.mxu0 %v948
    %1701 = vmatmul.mubr.f32.gmra.mrb[0].mxu0 %v947
    %v1702 = vpop.f32.mrb[0].mxu0
    %v1703 = vadd.f32 0.0, %v1702
    %v1704 = vpop.f32.mrb[0].mxu0
    %1705 = vmatprep.mubr.f32.mxu0 %v952
    %1706 = vmatmul.mubr.f32.gmra.mrb[0].mxu0 %v951
    %v1707 = vpop.f32.mrb[0].mxu0
    %v1708 = vadd.f32 0.0, %v1707
    %v1709 = vpop.f32.mrb[0].mxu0
    %1710 = vmatprep.mubr.f32.mxu0 %v956
    %1711 = vmatmul.mubr.f32.gmra.mrb[0].mxu0 %v955
    %v1712 = vpop.f32.mrb[0].mxu0
    %v1713 = vadd.f32 0.0, %v1712
    %v1714 = vpop.f32.mrb[0].mxu0
    %1715 = vmatprep.mubr.f32.mxu0 %v960
    %1716 = vmatmul.mubr.f32.gmra.mrb[0].mxu0 %v959
    %v1717 = vpop.f32.mrb[0].mxu0
    %v1718 = vadd.f32 0.0, %v1717
    %v1719 = vpop.f32.mrb[0].mxu0
    %1720 = vmatprep.mubr.f32.mxu0 %v964
    %1721 = vmatmul.mubr.f32.gmra.mrb[0].mxu0 %v963
    %v1722 = vpop.f32.mrb[0].mxu0
    %v1723 = vadd.f32 0.0, %v1722
    %v1724 = vpop.f32.mrb[0].mxu0
    %1725 = vdwg.mxu0
    %1726 = vmatprep.subr.mxu0 0.0
    %1727 = vmatpush1.msra.mxu0 %v1469
    %1728 = vmatprep.subr.mxu0 0.0
    %1729 = vmatpush1.msra.mxu0 %v1470
    %1730 = vmatprep.subr.mxu0 0.0
    %1731 = vmatpush1.msra.mxu0 %v1471
    %1732 = vmatprep.subr.mxu0 0.0
    %1733 = vmatpush1.msra.mxu0 %v1472
    %1734 = vmatprep.subr.mxu0 0.0
    %1735 = vmatpush1.msra.mxu0 %v1473
    %1736 = vmatprep.subr.mxu0 0.0
    %1737 = vmatpush1.msra.mxu0 %v1474
    %1738 = vmatprep.subr.mxu0 0.0
    %1739 = vmatpush1.msra.mxu0 %v1475
    %1740 = vmatprep.subr.mxu0 0.0
    %1741 = vmatpush1.msra.mxu0 %v1476
    %1742 = vmatprep.subr.mxu0 0.0
    %1743 = vmatpush1.msra.mxu0 %v1477
    %1744 = vmatprep.subr.mxu0 0.0
    %1745 = vmatpush1.msra.mxu0 %v1478
    %1746 = vmatprep.subr.mxu0 0.0
    %1747 = vmatpush1.msra.mxu0 %v1479
    %1748 = vmatprep.subr.mxu0 0.0
    %1749 = vmatpush1.msra.mxu0 %v1480
    %1750 = vmatprep.subr.mxu0 0.0
    %1751 = vmatpush1.msra.mxu0 %v1481
    %1752 = vmatprep.subr.mxu0 0.0
    %1753 = vmatpush1.msra.mxu0 %v1482
    %1754 = vmatprep.subr.mxu0 0.0
    %1755 = vmatpush1.msra.mxu0 %v1483
    %1756 = vmatprep.subr.mxu0 0.0
    %1757 = vmatpush1.msra.mxu0 %v1484
    %1758 = vmatprep.subr.mxu0 0.0
    %1759 = vmatpush1.msra.mxu0 %v1485
    %1760 = vmatprep.subr.mxu0 0.0
    %1761 = vmatpush1.msra.mxu0 %v1486
    %1762 = vmatprep.subr.mxu0 0.0
    %1763 = vmatpush1.msra.mxu0 %v1487
    %1764 = vmatprep.subr.mxu0 0.0
    %1765 = vmatpush1.msra.mxu0 %v1488
    %1766 = vmatprep.subr.mxu0 0.0
    %1767 = vmatpush1.msra.mxu0 %v1489
    %1768 = vmatprep.subr.mxu0 0.0
    %1769 = vmatpush1.msra.mxu0 %v1490
    %1770 = vmatprep.subr.mxu0 0.0
    %1771 = vmatpush1.msra.mxu0 %v1491
    %1772 = vmatprep.subr.mxu0 0.0
    %1773 = vmatpush1.msra.mxu0 %v1492
    %1774 = vmatprep.subr.mxu0 0.0
    %1775 = vmatpush1.msra.mxu0 %v1493
    %1776 = vmatprep.subr.mxu0 0.0
    %1777 = vmatpush1.msra.mxu0 %v1494
    %1778 = vmatprep.subr.mxu0 0.0
    %1779 = vmatpush1.msra.mxu0 %v1495
    %1780 = vmatprep.subr.mxu0 0.0
    %1781 = vmatpush1.msra.mxu0 %v1496
    %1782 = vmatprep.subr.mxu0 0.0
    %1783 = vmatpush1.msra.mxu0 %v1497
    %1784 = vmatprep.subr.mxu0 0.0
    %1785 = vmatpush1.msra.mxu0 %v1498
    %1786 = vmatprep.subr.mxu0 0.0
    %1787 = vmatpush1.msra.mxu0 %v1499
    %1788 = vmatprep.subr.mxu0 0.0
    %1789 = vmatpush1.msra.mxu0 %v1500
    %1790 = vmatprep.mubr.f32.mxu0 %v842
    %1791 = vmatmul.mubr.f32.gmra.mrb[0].mxu0 %v841
    %v1792 = vpop.f32.mrb[0].mxu0
    %v1793 = vadd.f32 %v1568, %v1792
    %v1794 = vpop.f32.mrb[0].mxu0
    %1795 = vmatprep.mubr.f32.mxu0 %v846
    %1796 = vmatmul.mubr.f32.gmra.mrb[0].mxu0 %v845
    %v1797 = vpop.f32.mrb[0].mxu0
    %v1798 = vadd.f32 %v1573, %v1797
    %v1799 = vpop.f32.mrb[0].mxu0
    %1800 = vmatprep.mubr.f32.mxu0 %v850
    %1801 = vmatmul.mubr.f32.gmra.mrb[0].mxu0 %v849
    %v1802 = vpop.f32.mrb[0].mxu0
    %v1803 = vadd.f32 %v1578, %v1802
    %v1804 = vpop.f32.mrb[0].mxu0
    %1805 = vmatprep.mubr.f32.mxu0 %v854
    %1806 = vmatmul.mubr.f32.gmra.mrb[0].mxu0 %v853
    %v1807 = vpop.f32.mrb[0].mxu0
    %v1808 = vadd.f32 %v1583, %v1807
    %v1809 = vpop.f32.mrb[0].mxu0
    %1810 = vmatprep.mubr.f32.mxu0 %v858
    %1811 = vmatmul.mubr.f32.gmra.mrb[0].mxu0 %v857
    %v1812 = vpop.f32.mrb[0].mxu0
    %v1813 = vadd.f32 %v1588, %v1812
    %v1814 = vpop.f32.mrb[0].mxu0
    %1815 = vmatprep.mubr.f32.mxu0 %v862
    %1816 = vmatmul.mubr.f32.gmra.mrb[0].mxu0 %v861
    %v1817 = vpop.f32.mrb[0].mxu0
    %v1818 = vadd.f32 %v1593, %v1817
    %v1819 = vpop.f32.mrb[0].mxu0
    %1820 = vmatprep.mubr.f32.mxu0 %v866
    %1821 = vmatmul.mubr.f32.gmra.mrb[0].mxu0 %v865
    %v1822 = vpop.f32.mrb[0].mxu0
    %v1823 = vadd.f32 %v1598, %v1822
    %v1824 = vpop.f32.mrb[0].mxu0
    %1825 = vmatprep.mubr.f32.mxu0 %v870
    %1826 = vmatmul.mubr.f32.gmra.mrb[0].mxu0 %v869
    %v1827 = vpop.f32.mrb[0].mxu0
    %v1828 = vadd.f32 %v1603, %v1827
    %v1829 = vpop.f32.mrb[0].mxu0
    %1830 = vmatprep.mubr.f32.mxu0 %v874
    %1831 = vmatmul.mubr.f32.gmra.mrb[0].mxu0 %v873
    %v1832 = vpop.f32.mrb[0].mxu0
    %v1833 = vadd.f32 %v1608, %v1832
    %v1834 = vpop.f32.mrb[0].mxu0
    %1835 = vmatprep.mubr.f32.mxu0 %v878
    %1836 = vmatmul.mubr.f32.gmra.mrb[0].mxu0 %v877
    %v1837 = vpop.f32.mrb[0].mxu0
    %v1838 = vadd.f32 %v1613, %v1837
    %v1839 = vpop.f32.mrb[0].mxu0
    %1840 = vmatprep.mubr.f32.mxu0 %v882
    %1841 = vmatmul.mubr.f32.gmra.mrb[0].mxu0 %v881
    %v1842 = vpop.f32.mrb[0].mxu0
    %v1843 = vadd.f32 %v1618, %v1842
    %v1844 = vpop.f32.mrb[0].mxu0
    %1845 = vmatprep.mubr.f32.mxu0 %v886
    %1846 = vmatmul.mubr.f32.gmra.mrb[0].mxu0 %v885
    %v1847 = vpop.f32.mrb[0].mxu0
    %v1848 = vadd.f32 %v1623, %v1847
    %v1849 = vpop.f32.mrb[0].mxu0
    %1850 = vmatprep.mubr.f32.mxu0 %v890
    %1851 = vmatmul.mubr.f32.gmra.mrb[0].mxu0 %v889
    %v1852 = vpop.f32.mrb[0].mxu0
    %v1853 = vadd.f32 %v1628, %v1852
    %v1854 = vpop.f32.mrb[0].mxu0
    %1855 = vmatprep.mubr.f32.mxu0 %v894
    %1856 = vmatmul.mubr.f32.gmra.mrb[0].mxu0 %v893
    %v1857 = vpop.f32.mrb[0].mxu0
    %v1858 = vadd.f32 %v1633, %v1857
    %v1859 = vpop.f32.mrb[0].mxu0
    %1860 = vmatprep.mubr.f32.mxu0 %v898
    %1861 = vmatmul.mubr.f32.gmra.mrb[0].mxu0 %v897
    %v1862 = vpop.f32.mrb[0].mxu0
    %v1863 = vadd.f32 %v1638, %v1862
    %v1864 = vpop.f32.mrb[0].mxu0
    %1865 = vmatprep.mubr.f32.mxu0 %v902
    %1866 = vmatmul.mubr.f32.gmra.mrb[0].mxu0 %v901
    %v1867 = vpop.f32.mrb[0].mxu0
    %v1868 = vadd.f32 %v1643, %v1867
    %v1869 = vpop.f32.mrb[0].mxu0
    %1870 = vmatprep.mubr.f32.mxu0 %v906
    %1871 = vmatmul.mubr.f32.gmra.mrb[0].mxu0 %v905
    %v1872 = vpop.f32.mrb[0].mxu0
    %v1873 = vadd.f32 %v1648, %v1872
    %v1874 = vpop.f32.mrb[0].mxu0
    %1875 = vmatprep.mubr.f32.mxu0 %v910
    %1876 = vmatmul.mubr.f32.gmra.mrb[0].mxu0 %v909
    %v1877 = vpop.f32.mrb[0].mxu0
    %v1878 = vadd.f32 %v1653, %v1877
    %v1879 = vpop.f32.mrb[0].mxu0
    %1880 = vmatprep.mubr.f32.mxu0 %v914
    %1881 = vmatmul.mubr.f32.gmra.mrb[0].mxu0 %v913
    %v1882 = vpop.f32.mrb[0].mxu0
    %v1883 = vadd.f32 %v1658, %v1882
    %v1884 = vpop.f32.mrb[0].mxu0
    %1885 = vmatprep.mubr.f32.mxu0 %v918
    %1886 = vmatmul.mubr.f32.gmra.mrb[0].mxu0 %v917
    %v1887 = vpop.f32.mrb[0].mxu0
    %v1888 = vadd.f32 %v1663, %v1887
    %v1889 = vpop.f32.mrb[0].mxu0
    %1890 = vmatprep.mubr.f32.mxu0 %v922
    %1891 = vmatmul.mubr.f32.gmra.mrb[0].mxu0 %v921
    %v1892 = vpop.f32.mrb[0].mxu0
    %v1893 = vadd.f32 %v1668, %v1892
    %v1894 = vpop.f32.mrb[0].mxu0
    %1895 = vmatprep.mubr.f32.mxu0 %v926
    %1896 = vmatmul.mubr.f32.gmra.mrb[0].mxu0 %v925
    %v1897 = vpop.f32.mrb[0].mxu0
    %v1898 = vadd.f32 %v1673, %v1897
    %v1899 = vpop.f32.mrb[0].mxu0
    %1900 = vmatprep.mubr.f32.mxu0 %v930
    %1901 = vmatmul.mubr.f32.gmra.mrb[0].mxu0 %v929
    %v1902 = vpop.f32.mrb[0].mxu0
    %v1903 = vadd.f32 %v1678, %v1902
    %v1904 = vpop.f32.mrb[0].mxu0
    %1905 = vmatprep.mubr.f32.mxu0 %v934
    %1906 = vmatmul.mubr.f32.gmra.mrb[0].mxu0 %v933
    %v1907 = vpop.f32.mrb[0].mxu0
    %v1908 = vadd.f32 %v1683, %v1907
    %v1909 = vpop.f32.mrb[0].mxu0
    %1910 = vmatprep.mubr.f32.mxu0 %v938
    %1911 = vmatmul.mubr.f32.gmra.mrb[0].mxu0 %v937
    %v1912 = vpop.f32.mrb[0].mxu0
    %v1913 = vadd.f32 %v1688, %v1912
    %v1914 = vpop.f32.mrb[0].mxu0
    %1915 = vmatprep.mubr.f32.mxu0 %v942
    %1916 = vmatmul.mubr.f32.gmra.mrb[0].mxu0 %v941
    %v1917 = vpop.f32.mrb[0].mxu0
    %v1918 = vadd.f32 %v1693, %v1917
    %v1919 = vpop.f32.mrb[0].mxu0
    %1920 = vmatprep.mubr.f32.mxu0 %v946
    %1921 = vmatmul.mubr.f32.gmra.mrb[0].mxu0 %v945
    %v1922 = vpop.f32.mrb[0].mxu0
    %v1923 = vadd.f32 %v1698, %v1922
    %v1924 = vpop.f32.mrb[0].mxu0
    %1925 = vmatprep.mubr.f32.mxu0 %v950
    %1926 = vmatmul.mubr.f32.gmra.mrb[0].mxu0 %v949
    %v1927 = vpop.f32.mrb[0].mxu0
    %v1928 = vadd.f32 %v1703, %v1927
    %v1929 = vpop.f32.mrb[0].mxu0
    %1930 = vmatprep.mubr.f32.mxu0 %v954
    %1931 = vmatmul.mubr.f32.gmra.mrb[0].mxu0 %v953
    %v1932 = vpop.f32.mrb[0].mxu0
    %v1933 = vadd.f32 %v1708, %v1932
    %v1934 = vpop.f32.mrb[0].mxu0
    %1935 = vmatprep.mubr.f32.mxu0 %v958
    %1936 = vmatmul.mubr.f32.gmra.mrb[0].mxu0 %v957
    %v1937 = vpop.f32.mrb[0].mxu0
    %v1938 = vadd.f32 %v1713, %v1937
    %v1939 = vpop.f32.mrb[0].mxu0
    %1940 = vmatprep.mubr.f32.mxu0 %v962
    %1941 = vmatmul.mubr.f32.gmra.mrb[0].mxu0 %v961
    %v1942 = vpop.f32.mrb[0].mxu0
    %v1943 = vadd.f32 %v1718, %v1942
    %v1944 = vpop.f32.mrb[0].mxu0
    %1945 = vmatprep.mubr.f32.mxu0 %v966
    %1946 = vmatmul.mubr.f32.gmra.mrb[0].mxu0 %v965
    %v1947 = vpop.f32.mrb[0].mxu0
    %v1948 = vadd.f32 %v1723, %v1947
    %v1949 = vpop.f32.mrb[0].mxu0
    %1950 = vdwg.mxu0
    %v1951 = vadd.f32 %v1405, %v1793
    %v1952 = vadd.f32 %v1406, %v1798
    %v1953 = vadd.f32 %v1407, %v1803
    %v1954 = vadd.f32 %v1408, %v1808
    %v1955 = vadd.f32 %v1409, %v1813
    %v1956 = vadd.f32 %v1410, %v1818
    %v1957 = vadd.f32 %v1411, %v1823
    %v1958 = vadd.f32 %v1412, %v1828
    %v1959 = vadd.f32 %v1413, %v1833
    %v1960 = vadd.f32 %v1414, %v1838
    %v1961 = vadd.f32 %v1415, %v1843
    %v1962 = vadd.f32 %v1416, %v1848
    %v1963 = vadd.f32 %v1417, %v1853
    %v1964 = vadd.f32 %v1418, %v1858
    %v1965 = vadd.f32 %v1419, %v1863
    %v1966 = vadd.f32 %v1420, %v1868
    %v1967 = vadd.f32 %v1421, %v1873
    %v1968 = vadd.f32 %v1422, %v1878
    %v1969 = vadd.f32 %v1423, %v1883
    %v1970 = vadd.f32 %v1424, %v1888
    %v1971 = vadd.f32 %v1425, %v1893
    %v1972 = vadd.f32 %v1426, %v1898
    %v1973 = vadd.f32 %v1427, %v1903
    %v1974 = vadd.f32 %v1428, %v1908
    %v1975 = vadd.f32 %v1429, %v1913
    %v1976 = vadd.f32 %v1430, %v1918
    %v1977 = vadd.f32 %v1431, %v1923
    %v1978 = vadd.f32 %v1432, %v1928
    %v1979 = vadd.f32 %v1433, %v1933
    %v1980 = vadd.f32 %v1434, %v1938
    %v1981 = vadd.f32 %v1435, %v1943
    %v1982 = vadd.f32 %v1436, %v1948
    %1983 = vst [vmem:[#allocation3] sm:$0xff] %v1951
    %1984 = vst [vmem:[#allocation3 + $0x8] sm:$0xff] %v1952
    %1985 = vst [vmem:[#allocation3 + $0x10] sm:$0xff] %v1953
    %1986 = vst [vmem:[#allocation3 + $0x18] sm:$0xff] %v1954
    %1987 = vst [vmem:[#allocation3 + $0x20] sm:$0xff] %v1955
    %1988 = vst [vmem:[#allocation3 + $0x28] sm:$0xff] %v1956
    %1989 = vst [vmem:[#allocation3 + $0x30] sm:$0xff] %v1957
    %1990 = vst [vmem:[#allocation3 + $0x38] sm:$0xff] %v1958
    %1991 = vst [vmem:[#allocation3 + $0x40] sm:$0xff] %v1959
    %1992 = vst [vmem:[#allocation3 + $0x48] sm:$0xff] %v1960
    %1993 = vst [vmem:[#allocation3 + $0x50] sm:$0xff] %v1961
    %1994 = vst [vmem:[#allocation3 + $0x58] sm:$0xff] %v1962
    %1995 = vst [vmem:[#allocation3 + $0x60] sm:$0xff] %v1963
    %1996 = vst [vmem:[#allocation3 + $0x68] sm:$0xff] %v1964
    %1997 = vst [vmem:[#allocation3 + $0x70] sm:$0xff] %v1965
    %1998 = vst [vmem:[#allocation3 + $0x78] sm:$0xff] %v1966
    %1999 = vst [vmem:[#allocation3 + $0x80] sm:$0xff] %v1967
    %2000 = vst [vmem:[#allocation3 + $0x88] sm:$0xff] %v1968
    %2001 = vst [vmem:[#allocation3 + $0x90] sm:$0xff] %v1969
    %2002 = vst [vmem:[#allocation3 + $0x98] sm:$0xff] %v1970
    %2003 = vst [vmem:[#allocation3 + $0xa0] sm:$0xff] %v1971
    %2004 = vst [vmem:[#allocation3 + $0xa8] sm:$0xff] %v1972
    %2005 = vst [vmem:[#allocation3 + $0xb0] sm:$0xff] %v1973
    %2006 = vst [vmem:[#allocation3 + $0xb8] sm:$0xff] %v1974
    %2007 = vst [vmem:[#allocation3 + $0xc0] sm:$0xff] %v1975
    %2008 = vst [vmem:[#allocation3 + $0xc8] sm:$0xff] %v1976
    %2009 = vst [vmem:[#allocation3 + $0xd0] sm:$0xff] %v1977
    %2010 = vst [vmem:[#allocation3 + $0xd8] sm:$0xff] %v1978
    %2011 = vst [vmem:[#allocation3 + $0xe0] sm:$0xff] %v1979
    %2012 = vst [vmem:[#allocation3 + $0xe8] sm:$0xff] %v1980
    %2013 = vst [vmem:[#allocation3 + $0xf0] sm:$0xff] %v1981
    %2014 = vst [vmem:[#allocation3 + $0xf8] sm:$0xff] %v1982
    // Predicated region
    $region38: #{tpu_custom_call.1} parent=1 // pred_check
      %p2015 = pneg %p68
    $region39: #{tpu_custom_call.1} parent=1 // pred_check_branch
      %2017 = sbr.rel (%p2015) target = $region41
    $region40: #{tpu_custom_call.1} parent=1 // pred_region
      %v2018 = vld [vmem:[#allocation3] sm:$0xff]
      %v2019 = vld [vmem:[#allocation3 + $0x8] sm:$0xff]
      %v2020 = vld [vmem:[#allocation3 + $0x10] sm:$0xff]
      %v2021 = vld [vmem:[#allocation3 + $0x18] sm:$0xff]
      %v2022 = vld [vmem:[#allocation3 + $0x20] sm:$0xff]
      %v2023 = vld [vmem:[#allocation3 + $0x28] sm:$0xff]
      %v2024 = vld [vmem:[#allocation3 + $0x30] sm:$0xff]
      %v2025 = vld [vmem:[#allocation3 + $0x38] sm:$0xff]
      %v2026 = vld [vmem:[#allocation3 + $0x40] sm:$0xff]
      %v2027 = vld [vmem:[#allocation3 + $0x48] sm:$0xff]
      %v2028 = vld [vmem:[#allocation3 + $0x50] sm:$0xff]
      %v2029 = vld [vmem:[#allocation3 + $0x58] sm:$0xff]
      %v2030 = vld [vmem:[#allocation3 + $0x60] sm:$0xff]
      %v2031 = vld [vmem:[#allocation3 + $0x68] sm:$0xff]
      %v2032 = vld [vmem:[#allocation3 + $0x70] sm:$0xff]
      %v2033 = vld [vmem:[#allocation3 + $0x78] sm:$0xff]
      %v2034 = vld [vmem:[#allocation3 + $0x80] sm:$0xff]
      %v2035 = vld [vmem:[#allocation3 + $0x88] sm:$0xff]
      %v2036 = vld [vmem:[#allocation3 + $0x90] sm:$0xff]
      %v2037 = vld [vmem:[#allocation3 + $0x98] sm:$0xff]
      %v2038 = vld [vmem:[#allocation3 + $0xa0] sm:$0xff]
      %v2039 = vld [vmem:[#allocation3 + $0xa8] sm:$0xff]
      %v2040 = vld [vmem:[#allocation3 + $0xb0] sm:$0xff]
      %v2041 = vld [vmem:[#allocation3 + $0xb8] sm:$0xff]
      %v2042 = vld [vmem:[#allocation3 + $0xc0] sm:$0xff]
      %v2043 = vld [vmem:[#allocation3 + $0xc8] sm:$0xff]
      %v2044 = vld [vmem:[#allocation3 + $0xd0] sm:$0xff]
      %v2045 = vld [vmem:[#allocation3 + $0xd8] sm:$0xff]
      %v2046 = vld [vmem:[#allocation3 + $0xe0] sm:$0xff]
      %v2047 = vld [vmem:[#allocation3 + $0xe8] sm:$0xff]
      %v2048 = vld [vmem:[#allocation3 + $0xf0] sm:$0xff]
      %v2049 = vld [vmem:[#allocation3 + $0xf8] sm:$0xff]
      %v2050 = vld [vmem:[%s4] sm:$0x1]
      %v2052 = vlaneseq
      %v2053 = vshrl.u32 %v2052, 7
      %v2054 = vsub.s32 0, %v2053
      %v2055 = vrot.slane %v2050, %v2054
      %v2057 = vadd.f32 %v2018, %v2055
      %v2058 = vadd.f32 %v2019, %v2055
      %v2059 = vadd.f32 %v2020, %v2055
      %v2060 = vadd.f32 %v2021, %v2055
      %v2061 = vadd.f32 %v2022, %v2055
      %v2062 = vadd.f32 %v2023, %v2055
      %v2063 = vadd.f32 %v2024, %v2055
      %v2064 = vadd.f32 %v2025, %v2055
      %v2065 = vadd.f32 %v2026, %v2055
      %v2066 = vadd.f32 %v2027, %v2055
      %v2067 = vadd.f32 %v2028, %v2055
      %v2068 = vadd.f32 %v2029, %v2055
      %v2069 = vadd.f32 %v2030, %v2055
      %v2070 = vadd.f32 %v2031, %v2055
      %v2071 = vadd.f32 %v2032, %v2055
      %v2072 = vadd.f32 %v2033, %v2055
      %v2073 = vadd.f32 %v2034, %v2055
      %v2074 = vadd.f32 %v2035, %v2055
      %v2075 = vadd.f32 %v2036, %v2055
      %v2076 = vadd.f32 %v2037, %v2055
      %v2077 = vadd.f32 %v2038, %v2055
      %v2078 = vadd.f32 %v2039, %v2055
      %v2079 = vadd.f32 %v2040, %v2055
      %v2080 = vadd.f32 %v2041, %v2055
      %v2081 = vadd.f32 %v2042, %v2055
      %v2082 = vadd.f32 %v2043, %v2055
      %v2083 = vadd.f32 %v2044, %v2055
      %v2084 = vadd.f32 %v2045, %v2055
      %v2085 = vadd.f32 %v2046, %v2055
      %v2086 = vadd.f32 %v2047, %v2055
      %v2087 = vadd.f32 %v2048, %v2055
      %v2088 = vadd.f32 %v2049, %v2055
      %2089 = vst [vmem:[#allocation10] sm:$0xff] %v2057
      %2090 = vst [vmem:[#allocation10 + $0x8] sm:$0xff] %v2058
      %2091 = vst [vmem:[#allocation10 + $0x10] sm:$0xff] %v2059
      %2092 = vst [vmem:[#allocation10 + $0x18] sm:$0xff] %v2060
      %2093 = vst [vmem:[#allocation10 + $0x20] sm:$0xff] %v2061
      %2094 = vst [vmem:[#allocation10 + $0x28] sm:$0xff] %v2062
      %2095 = vst [vmem:[#allocation10 + $0x30] sm:$0xff] %v2063
      %2096 = vst [vmem:[#allocation10 + $0x38] sm:$0xff] %v2064
      %2097 = vst [vmem:[#allocation10 + $0x40] sm:$0xff] %v2065
      %2098 = vst [vmem:[#allocation10 + $0x48] sm:$0xff] %v2066
      %2099 = vst [vmem:[#allocation10 + $0x50] sm:$0xff] %v2067
      %2100 = vst [vmem:[#allocation10 + $0x58] sm:$0xff] %v2068
      %2101 = vst [vmem:[#allocation10 + $0x60] sm:$0xff] %v2069
      %2102 = vst [vmem:[#allocation10 + $0x68] sm:$0xff] %v2070
      %2103 = vst [vmem:[#allocation10 + $0x70] sm:$0xff] %v2071
      %2104 = vst [vmem:[#allocation10 + $0x78] sm:$0xff] %v2072
      %2105 = vst [vmem:[#allocation10 + $0x80] sm:$0xff] %v2073
      %2106 = vst [vmem:[#allocation10 + $0x88] sm:$0xff] %v2074
      %2107 = vst [vmem:[#allocation10 + $0x90] sm:$0xff] %v2075
      %2108 = vst [vmem:[#allocation10 + $0x98] sm:$0xff] %v2076
      %2109 = vst [vmem:[#allocation10 + $0xa0] sm:$0xff] %v2077
      %2110 = vst [vmem:[#allocation10 + $0xa8] sm:$0xff] %v2078
      %2111 = vst [vmem:[#allocation10 + $0xb0] sm:$0xff] %v2079
      %2112 = vst [vmem:[#allocation10 + $0xb8] sm:$0xff] %v2080
      %2113 = vst [vmem:[#allocation10 + $0xc0] sm:$0xff] %v2081
      %2114 = vst [vmem:[#allocation10 + $0xc8] sm:$0xff] %v2082
      %2115 = vst [vmem:[#allocation10 + $0xd0] sm:$0xff] %v2083
      %2116 = vst [vmem:[#allocation10 + $0xd8] sm:$0xff] %v2084
      %2117 = vst [vmem:[#allocation10 + $0xe0] sm:$0xff] %v2085
      %2118 = vst [vmem:[#allocation10 + $0xe8] sm:$0xff] %v2086
      %2119 = vst [vmem:[#allocation10 + $0xf0] sm:$0xff] %v2087
      %2120 = vst [vmem:[#allocation10 + $0xf8] sm:$0xff] %v2088
      %v2121 = vld [vmem:[#allocation4] sm:$0xff]
      %v2122 = vld [vmem:[#allocation4 + $0x8] sm:$0xff]
      %v2123 = vld [vmem:[#allocation4 + $0x10] sm:$0xff]
      %v2124 = vld [vmem:[#allocation4 + $0x18] sm:$0xff]
      %v2125 = vld [vmem:[#allocation4 + $0x20] sm:$0xff]
      %v2126 = vld [vmem:[#allocation4 + $0x28] sm:$0xff]
      %v2127 = vld [vmem:[#allocation4 + $0x30] sm:$0xff]
      %v2128 = vld [vmem:[#allocation4 + $0x38] sm:$0xff]
      %v2129 = vld [vmem:[#allocation4 + $0x40] sm:$0xff]
      %v2130 = vld [vmem:[#allocation4 + $0x48] sm:$0xff]
      %v2131 = vld [vmem:[#allocation4 + $0x50] sm:$0xff]
      %v2132 = vld [vmem:[#allocation4 + $0x58] sm:$0xff]
      %v2133 = vld [vmem:[#allocation4 + $0x60] sm:$0xff]
      %v2134 = vld [vmem:[#allocation4 + $0x68] sm:$0xff]
      %v2135 = vld [vmem:[#allocation4 + $0x70] sm:$0xff]
      %v2136 = vld [vmem:[#allocation4 + $0x78] sm:$0xff]
      %v2137 = vld [vmem:[#allocation4 + $0x80] sm:$0xff]
      %v2138 = vld [vmem:[#allocation4 + $0x88] sm:$0xff]
      %v2139 = vld [vmem:[#allocation4 + $0x90] sm:$0xff]
      %v2140 = vld [vmem:[#allocation4 + $0x98] sm:$0xff]
      %v2141 = vld [vmem:[#allocation4 + $0xa0] sm:$0xff]
      %v2142 = vld [vmem:[#allocation4 + $0xa8] sm:$0xff]
      %v2143 = vld [vmem:[#allocation4 + $0xb0] sm:$0xff]
      %v2144 = vld [vmem:[#allocation4 + $0xb8] sm:$0xff]
      %v2145 = vld [vmem:[#allocation4 + $0xc0] sm:$0xff]
      %v2146 = vld [vmem:[#allocation4 + $0xc8] sm:$0xff]
      %v2147 = vld [vmem:[#allocation4 + $0xd0] sm:$0xff]
      %v2148 = vld [vmem:[#allocation4 + $0xd8] sm:$0xff]
      %v2149 = vld [vmem:[#allocation4 + $0xe0] sm:$0xff]
      %v2150 = vld [vmem:[#allocation4 + $0xe8] sm:$0xff]
      %v2151 = vld [vmem:[#allocation4 + $0xf0] sm:$0xff]
      %v2152 = vld [vmem:[#allocation4 + $0xf8] sm:$0xff]
      %v2153 = vsub.f32 %v2057, %v2121
      %v2154 = vsub.f32 %v2058, %v2122
      %v2155 = vsub.f32 %v2059, %v2123
      %v2156 = vsub.f32 %v2060, %v2124
      %v2157 = vsub.f32 %v2061, %v2125
      %v2158 = vsub.f32 %v2062, %v2126
      %v2159 = vsub.f32 %v2063, %v2127
      %v2160 = vsub.f32 %v2064, %v2128
      %v2161 = vsub.f32 %v2065, %v2129
      %v2162 = vsub.f32 %v2066, %v2130
      %v2163 = vsub.f32 %v2067, %v2131
      %v2164 = vsub.f32 %v2068, %v2132
      %v2165 = vsub.f32 %v2069, %v2133
      %v2166 = vsub.f32 %v2070, %v2134
      %v2167 = vsub.f32 %v2071, %v2135
      %v2168 = vsub.f32 %v2072, %v2136
      %v2169 = vsub.f32 %v2073, %v2137
      %v2170 = vsub.f32 %v2074, %v2138
      %v2171 = vsub.f32 %v2075, %v2139
      %v2172 = vsub.f32 %v2076, %v2140
      %v2173 = vsub.f32 %v2077, %v2141
      %v2174 = vsub.f32 %v2078, %v2142
      %v2175 = vsub.f32 %v2079, %v2143
      %v2176 = vsub.f32 %v2080, %v2144
      %v2177 = vsub.f32 %v2081, %v2145
      %v2178 = vsub.f32 %v2082, %v2146
      %v2179 = vsub.f32 %v2083, %v2147
      %v2180 = vsub.f32 %v2084, %v2148
      %v2181 = vsub.f32 %v2085, %v2149
      %v2182 = vsub.f32 %v2086, %v2150
      %v2183 = vsub.f32 %v2087, %v2151
      %v2184 = vsub.f32 %v2088, %v2152
      %v2185 = vmul.f32 %v2153, %v2153
      %v2186 = vmul.f32 %v2154, %v2154
      %v2187 = vmul.f32 %v2155, %v2155
      %v2188 = vmul.f32 %v2156, %v2156
      %v2189 = vmul.f32 %v2157, %v2157
      %v2190 = vmul.f32 %v2158, %v2158
      %v2191 = vmul.f32 %v2159, %v2159
      %v2192 = vmul.f32 %v2160, %v2160
      %v2193 = vmul.f32 %v2161, %v2161
      %v2194 = vmul.f32 %v2162, %v2162
      %v2195 = vmul.f32 %v2163, %v2163
      %v2196 = vmul.f32 %v2164, %v2164
      %v2197 = vmul.f32 %v2165, %v2165
      %v2198 = vmul.f32 %v2166, %v2166
      %v2199 = vmul.f32 %v2167, %v2167
      %v2200 = vmul.f32 %v2168, %v2168
      %v2201 = vmul.f32 %v2169, %v2169
      %v2202 = vmul.f32 %v2170, %v2170
      %v2203 = vmul.f32 %v2171, %v2171
      %v2204 = vmul.f32 %v2172, %v2172
      %v2205 = vmul.f32 %v2173, %v2173
      %v2206 = vmul.f32 %v2174, %v2174
      %v2207 = vmul.f32 %v2175, %v2175
      %v2208 = vmul.f32 %v2176, %v2176
      %v2209 = vmul.f32 %v2177, %v2177
      %v2210 = vmul.f32 %v2178, %v2178
      %v2211 = vmul.f32 %v2179, %v2179
      %v2212 = vmul.f32 %v2180, %v2180
      %v2213 = vmul.f32 %v2181, %v2181
      %v2214 = vmul.f32 %v2182, %v2182
      %v2215 = vmul.f32 %v2183, %v2183
      %v2216 = vmul.f32 %v2184, %v2184
      %v2217 = vadd.f32 %v2185, %v2186
      %v2218 = vadd.f32 %v2217, %v2187
      %v2219 = vadd.f32 %v2218, %v2188
      %v2220 = vadd.f32 %v2219, %v2189
      %v2221 = vadd.f32 %v2220, %v2190
      %v2222 = vadd.f32 %v2221, %v2191
      %v2223 = vadd.f32 %v2222, %v2192
      %v2224 = vadd.f32 %v2223, %v2193
      %v2225 = vadd.f32 %v2224, %v2194
      %v2226 = vadd.f32 %v2225, %v2195
      %v2227 = vadd.f32 %v2226, %v2196
      %v2228 = vadd.f32 %v2227, %v2197
      %v2229 = vadd.f32 %v2228, %v2198
      %v2230 = vadd.f32 %v2229, %v2199
      %v2231 = vadd.f32 %v2230, %v2200
      %v2232 = vadd.f32 %v2231, %v2201
      %v2233 = vadd.f32 %v2232, %v2202
      %v2234 = vadd.f32 %v2233, %v2203
      %v2235 = vadd.f32 %v2234, %v2204
      %v2236 = vadd.f32 %v2235, %v2205
      %v2237 = vadd.f32 %v2236, %v2206
      %v2238 = vadd.f32 %v2237, %v2207
      %v2239 = vadd.f32 %v2238, %v2208
      %v2240 = vadd.f32 %v2239, %v2209
      %v2241 = vadd.f32 %v2240, %v2210
      %v2242 = vadd.f32 %v2241, %v2211
      %v2243 = vadd.f32 %v2242, %v2212
      %v2244 = vadd.f32 %v2243, %v2213
      %v2245 = vadd.f32 %v2244, %v2214
      %v2246 = vadd.f32 %v2245, %v2215
      %v2247 = vadd.f32 %v2246, %v2216
      %v2248 = vrot.slane %v2247, 4
      %v2249 = vadd.f32 %v2247, %v2248
      %v2250 = vrot.slane %v2249, 2
      %v2251 = vadd.f32 %v2249, %v2250
      %v2252 = vrot.slane %v2251, 1
      %v2253 = vadd.f32 %v2251, %v2252
      %2254 = vst [vmem:[#allocation13] sm:$0x1] %v2253
    $region41: #{tpu_custom_call.1} parent=1 // pred_fallthru
      _
    // Predicated region
    $region42: #{tpu_custom_call.1} parent=1 // pred_check
      _
    $region43: #{tpu_custom_call.1} parent=1 // pred_check_branch
      %2256 = sbr.rel (0) target = $region45
    $region44: #{tpu_custom_call.1} parent=1 // pred_region
      %s2258 = ssub.s32 4096, 4096
      %2259 = vsyncadd [#allocation6], %s2258
      %s2260 = sshll.u32 [#allocation10], 4
      %s2261 = int_to_ptr.vmem [resolvable:$true] %s2260
      %2266 = dma.vmem_to_hbm [thread:$0]  %s2261, 4096, %s5, [#allocation6], 128, 128, 8
    $region45: #{tpu_custom_call.1} parent=1 // pred_fallthru
      _
    // Predicated region
    $region46: #{tpu_custom_call.1} parent=1 // pred_check
      _
    $region47: #{tpu_custom_call.1} parent=1 // pred_check_branch
      %2268 = sbr.rel (0) target = $region49
    $region48: #{tpu_custom_call.1} parent=1 // pred_region
      %s2270 = ssub.s32 16384, 16384
      %2271 = vsyncadd [#allocation12], %s2270
      %s2272 = sshll.u32 [#allocation11], 4
      %s2273 = int_to_ptr.vmem [resolvable:$true] %s2272
      %2278 = dma.vmem_to_hbm [thread:$0]  %s2273, 16384, %s6, [#allocation12], 512, 512, 32
    $region49: #{tpu_custom_call.1} parent=1 // pred_fallthru
      _
    // Predicated region
    $region50: #{tpu_custom_call.1} parent=1 // pred_check
      _
    $region51: #{tpu_custom_call.1} parent=1 // pred_check_branch
      %2280 = sbr.rel (0) target = $region53
    $region52: #{tpu_custom_call.1} parent=1 // pred_region
      %s2282 = ssub.s32 16, 16
      %2283 = vsyncadd [#allocation12], %s2282
      %s2285 = sshll.u32 [#allocation13], 4
      %s2286 = int_to_ptr.vmem [resolvable:$true] %s2285
      %2288 = dma.vmem_to_hbm [thread:$0]  %s2286, 16, %s7, [#allocation12]
    $region53: #{tpu_custom_call.1} parent=1 // pred_fallthru
      _
    // Predicated region
    $region54: #{tpu_custom_call.1} parent=1 // pred_check
      _
    $region55: #{tpu_custom_call.1} parent=1 // pred_check_branch
      %2290 = sbr.rel (0) target = $region57
    $region56: #{tpu_custom_call.1} parent=1 // pred_region
      %s2292 = ssub.s32 64, 64
      %2293 = vsyncadd [#allocation15], %s2292
      %s2295 = sshll.u32 [#allocation14], 4
      %s2296 = int_to_ptr.vmem [resolvable:$true] %s2295
      %2298 = dma.vmem_to_hbm [thread:$0]  %s2296, 64, %s8, [#allocation15]
    $region57: #{tpu_custom_call.1} parent=1 // pred_fallthru
      _
    // Predicated region
    $region58: #{tpu_custom_call.1} parent=1 // pred_check
      _
    $region59: #{tpu_custom_call.1} parent=1 // pred_check_branch
      %2300 = sbr.rel (0) target = $region61
    $region60: #{tpu_custom_call.1} parent=1 // pred_region
      %2301 = dma.done [#allocation6], 4096
    $region61: #{tpu_custom_call.1} parent=1 // pred_fallthru
      _
    // Predicated region
    $region62: #{tpu_custom_call.1} parent=1 // pred_check
      _
    $region63: #{tpu_custom_call.1} parent=1 // pred_check_branch
      %2303 = sbr.rel (0) target = $region65
    $region64: #{tpu_custom_call.1} parent=1 // pred_region
      %2304 = dma.done [#allocation12], 16384
    $region65: #{tpu_custom_call.1} parent=1 // pred_fallthru
      _
    // Predicated region
    $region66: #{tpu_custom_call.1} parent=1 // pred_check
      _
    $region67: #{tpu_custom_call.1} parent=1 // pred_check_branch
      %2306 = sbr.rel (0) target = $region69
    $region68: #{tpu_custom_call.1} parent=1 // pred_region
      %2307 = dma.done [#allocation12], 16
    $region69: #{tpu_custom_call.1} parent=1 // pred_fallthru
      _
    // Predicated region
    $region70: #{tpu_custom_call.1} parent=1 // pred_check
      _
    $region71: #{tpu_custom_call.1} parent=1 // pred_check_branch
      %2309 = sbr.rel (0) target = $region73
    $region72: #{tpu_custom_call.1} parent=1 // pred_region
      %2310 = dma.done [#allocation15], 64
    $region73: #{tpu_custom_call.1} parent=1 // pred_fallthru
      _
    %2311 = vsyncpa [#allocation5], 1
    %2312 = vsyncpa [#allocation8], 1
    %2313 = vsyncpa [#allocation6], 1
    %2314 = vsyncpa [#allocation12], 1
    %2315 = vsyncpa [#allocation15], 1

</llo_original>
